<compile_context>
chip_gen: v7x
topology: tpu7x:2x2x1
jax: 0.10.0
libtpu: 0.0.40
codegen_flags: <defaults>
</compile_context>

<pallas_src>
import jax
import jax.numpy as jnp
from jax.experimental import pallas as pl
from jax.experimental.pallas import tpu as pltpu


# -----------------------------------------------------------------------------
# Pallas kernel: whole forward hot path in transposed (batch-in-lanes) layout.
# -----------------------------------------------------------------------------
def _pinn_kernel(
    xT_ref,                  # [2, TN]            row 0 = x, row 1 = t
    wx_ref, wt_ref, b_ref,   # [3W, 1] each       fused U|V|H encoder (transposed)
    wz_ref, bz_ref,          # [NB, W, W], [NB, W, 1]   gated blocks (transposed)
    wo_ref, bo_ref,          # [n_out, W], [n_out, 1]   linear head (transposed)
    centers_ref,             # [P, 1]             Gaussian centers
    coeffs_ref,              # [1, P]             Gaussian coefficients
    scal_ref,                # SMEM [2]: (time_bubble_beta, 1/(2*sigma^2))
    out_ref,                 # [n_out, TN]        lane-dense output slab
):
    xt = xT_ref[...].astype(jnp.float32)
    x_row = xt[0:1, :]                           # [1, TN]
    t_row = xt[1:2, :]                           # [1, TN]

    beta = scal_ref[0]
    inv_two_sigma_sq = scal_ref[1]

    # time bubble: 1 - exp(-beta * t); space bubble: x * (1 - x)
    bubble_t = 1.0 - jnp.exp(-beta * t_row)      # [1, TN]
    bubble_x = x_row * (1.0 - x_row)             # [1, TN]

    # ---- Wang2020 encoders U, V, H1: one broadcast-FMA + ONE fused tanh ----
    pre = wx_ref[...] * x_row + wt_ref[...] * t_row + b_ref[...]   # [3W, TN]
    uvh = jnp.tanh(pre)

    w = wo_ref.shape[1]                          # block width (static)
    u = uvh[0:w, :]
    v = uvh[w:2 * w, :]
    h = uvh[2 * w:3 * w, :]

    # ---- tanh-gated blocks (MXU matmuls, M=K=W, N=TN) ----
    nb = wz_ref.shape[0]                         # static
    for k in range(nb):
        zk = jnp.tanh(
            jnp.dot(wz_ref[k], h, preferred_element_type=jnp.float32) + bz_ref[k]
        )                                        # [W, TN]
        h = (1.0 - zk) * u + zk * v

    z = jnp.dot(wo_ref[...], h, preferred_element_type=jnp.float32) + bo_ref[...]
    # z: [n_out, TN]

    # ---- SumOfGaussians interpolation of the initial profile at x ----
    d = x_row - centers_ref[...]                              # [P, TN]
    g = jnp.exp(-(d * d) * inv_two_sigma_sq)                  # [P, TN]
    interp = jnp.dot(coeffs_ref[...], g,
                     preferred_element_type=jnp.float32)      # [1, TN] (MXU reduce)

    out_ref[...] = (interp + bubble_t * bubble_x * z).astype(out_ref.dtype)


# -----------------------------------------------------------------------------
# Wrapper: lane-dense tiling over the batch, padding for ragged sizes.
# -----------------------------------------------------------------------------
def hard_constrained_1d_pinn(x_t, params, *, tile_n=512):
    n = x_t.shape[0]
    w = params["w_u"].shape[1]
    nb = params["w_z"].shape[0]
    n_out = params["w_out"].shape[1]
    p = params["centers"].shape[1]

    # --- tile sizing: lane multiples; keep >=2 grid steps when batch allows --
    tile_n = max(128, (int(tile_n) // 128) * 128)
    if n > 128:
        half = -(-((n + 1) // 2) // 128) * 128   # ceil(n/2) rounded up to 128
        tile_n = min(tile_n, half)               # >=2 steps => both TCs on v7x
    grid = pl.cdiv(n, tile_n)
    n_pad = grid * tile_n

    # --- layout plumbing (tiny one-time XLA ops, outside the kernel) --------
    w_uvh = jnp.concatenate([params["w_u"], params["w_v"], params["w_h"]], axis=1)
    b_uvh = jnp.concatenate([params["b_u"], params["b_v"], params["b_h"]], axis=1)
    wx_col = w_uvh[0:1, :].T                      # [3W, 1]
    wt_col = w_uvh[1:2, :].T                      # [3W, 1]
    b_col = b_uvh.T                               # [3W, 1]
    wz_t = jnp.transpose(params["w_z"], (0, 2, 1))   # [NB, W, W]
    bz_t = jnp.transpose(params["b_z"], (0, 2, 1))   # [NB, W, 1]
    wo_t = params["w_out"].T                      # [n_out, W]
    bo_t = params["b_out"].T                      # [n_out, 1]
    centers_col = params["centers"].T             # [P, 1]
    coeffs_row = params["coeffs"]                 # [1, P]
    beta = params["scal"][0]
    sigma = params["scal"][1]
    scal2 = jnp.stack([beta, 0.5 / (sigma * sigma)]).astype(jnp.float32)

    xT = x_t.T.astype(jnp.float32)                # [2, n]  batch -> lanes
    if n_pad != n:
        xT = jnp.pad(xT, ((0, 0), (0, n_pad - n)))

    def full_spec(arr):
        nd = arr.ndim
        return pl.BlockSpec(arr.shape, lambda i, _nd=nd: (0,) * _nd)

    in_specs = [
        pl.BlockSpec((2, tile_n), lambda i: (0, i)),             # x_t tile (transposed)
        full_spec(wx_col), full_spec(wt_col), full_spec(b_col),  # fused encoder
        full_spec(wz_t), full_spec(bz_t),                        # gated blocks
        full_spec(wo_t), full_spec(bo_t),                        # head
        full_spec(centers_col), full_spec(coeffs_row),           # RBF
        pl.BlockSpec(memory_space=pltpu.MemorySpace.SMEM),       # (beta, 1/(2*sigma^2))
    ]
    out_specs = pl.BlockSpec((n_out, tile_n), lambda i: (0, i))  # lane-dense output

    # Advisory cost hint: this kernel is EUP-heavy (tanh/exp), matmuls are tiny.
    flops = n_pad * (4 * 3 * w + nb * 2 * w * w + 2 * w * n_out + 4 * p + 16)
    transcendentals = n_pad * (3 * w + nb * w + p + 1)
    bytes_accessed = 4 * (n_pad * 2 + n_pad * n_out
                          + 9 * w + nb * (w * w + w) + w * n_out + n_out + 2 * p + 2)
    cost = pl.CostEstimate(flops=int(flops),
                           transcendentals=int(transcendentals),
                           bytes_accessed=int(bytes_accessed))

    compiler_kwargs = dict(dimension_semantics=("parallel",))
    if tile_n >= 4096:
        # Very large tiles (v5e default scoped VMEM is 16 MiB): raise the limit.
        compiler_kwargs["vmem_limit_bytes"] = 48 * 1024 * 1024

    out_T = pl.pallas_call(
        _pinn_kernel,
        out_shape=jax.ShapeDtypeStruct((n_out, n_pad), jnp.float32),
        grid=(grid,),
        in_specs=in_specs,
        out_specs=out_specs,
        compiler_params=pltpu.CompilerParams(**compiler_kwargs),
        cost_estimate=cost,
    )(
        xT,
        wx_col, wt_col, b_col,
        wz_t, bz_t,
        wo_t, bo_t,
        centers_col, coeffs_row,
        scal2,
    )
    return out_T[:, :n].T                         # back to [N, n_out]


# -----------------------------------------------------------------------------
# Pure-JAX reference (same math, original layout) for a silent correctness check.
# -----------------------------------------------------------------------------
def reference_forward(x_t, params):
    x = x_t[:, 0:1]
    t = x_t[:, 1:2]
    beta, sigma = params["scal"][0], params["scal"][1]
    bubble_t = 1.0 - jnp.exp(-beta * t)
    bubble_x = x * (1.0 - x)

    u = jnp.tanh(x_t @ params["w_u"] + params["b_u"])
    v = jnp.tanh(x_t @ params["w_v"] + params["b_v"])
    h = jnp.tanh(x_t @ params["w_h"] + params["b_h"])
    for k in range(params["w_z"].shape[0]):
        zk = jnp.tanh(h @ params["w_z"][k] + params["b_z"][k])
        h = (1.0 - zk) * u + zk * v
    z = h @ params["w_out"] + params["b_out"]

    d = x - params["centers"]
    g = jnp.exp(-(d * d) / (2.0 * sigma * sigma))
    interp = jnp.sum(g * params["coeffs"], axis=-1, keepdims=True)
    return interp + bubble_t * bubble_x * z


# -----------------------------------------------------------------------------
# Deterministic parameter construction (shapes from the module __init__).
# -----------------------------------------------------------------------------
def make_params(key, *, number_of_blocks, block_width, number_of_outputs,
                initial_profile, interpolator_sigma=0.1, time_bubble_beta=2.0):
    w = block_width
    keys = jax.random.split(key, 4 + number_of_blocks)

    def lin(k, fan_in, fan_out):
        bound = 1.0 / jnp.sqrt(jnp.float32(fan_in))
        kw, kb = jax.random.split(k)
        wgt = jax.random.uniform(kw, (fan_in, fan_out), jnp.float32, -bound, bound)
        bias = jax.random.uniform(kb, (1, fan_out), jnp.float32, -bound, bound)
        return wgt, bias

    w_u, b_u = lin(keys[0], 2, w)
    w_v, b_v = lin(keys[1], 2, w)
    w_h, b_h = lin(keys[2], 2, w)
    w_z_list, b_z_list = [], []
    for k in range(number_of_blocks):
        wz, bz = lin(keys[3 + k], w, w)
        w_z_list.append(wz)
        b_z_list.append(bz)
    w_out, b_out = lin(keys[3 + number_of_blocks], w, number_of_outputs)

    # SumOfGaussians interpolator of the initial profile (exact at the samples).
    # TODO(synk): the linear solve is one-time setup, kept in plain JAX (not a kernel op).
    profile = jnp.asarray(initial_profile, jnp.float32)
    p = profile.shape[0]
    xs = jnp.linspace(0.0, 1.0, p).astype(jnp.float32)
    kmat = jnp.exp(-((xs[:, None] - xs[None, :]) ** 2)
                   / (2.0 * interpolator_sigma ** 2))
    coeffs = jnp.linalg.solve(kmat, profile)

    return {
        "w_u": w_u, "b_u": b_u,
        "w_v": w_v, "b_v": b_v,
        "w_h": w_h, "b_h": b_h,
        "w_z": jnp.stack(w_z_list, 0), "b_z": jnp.stack(b_z_list, 0),
        "w_out": w_out, "b_out": b_out,
        "centers": xs[None, :], "coeffs": coeffs[None, :],
        "scal": jnp.array([time_bubble_beta, interpolator_sigma], jnp.float32),
    }


if __name__ == "__main__":
    key = jax.random.PRNGKey(0)
    k_param, k_x = jax.random.split(key)

    number_of_blocks = 2
    block_width = 32
    number_of_outputs = 1
    profile_pts = 9  # initial profile sampled on 9 points of [0, 1]
    xs_profile = jnp.linspace(0.0, 1.0, profile_pts)
    initial_profile = jnp.sin(jnp.pi * xs_profile)

    params = make_params(
        k_param,
        number_of_blocks=number_of_blocks,
        block_width=block_width,
        number_of_outputs=number_of_outputs,
        initial_profile=initial_profile,
        interpolator_sigma=0.1,
        time_bubble_beta=2.0,
    )

    batch = 1000  # ragged on purpose: exercises cdiv grid + zero padding
    x_t = jax.random.uniform(k_x, (batch, 2), jnp.float32)  # (x, t) in [0, 1)^2

    out = hard_constrained_1d_pinn(x_t, params, tile_n=512)
    out = jax.block_until_ready(out)

    ref = reference_forward(x_t, params)
    assert out.shape == (batch, number_of_outputs)
    assert jnp.allclose(out, ref, atol=1e-3, rtol=1e-3), "mismatch vs reference"
    print("KERNEL_OK")
</pallas_src>

<mosaic_0001>
module attributes {stable_mosaic.version = 11 : i64} {
  func.func @_pinn_kernel(%arg0: i32, %arg1: memref<2x512xf32, #tpu.memory_space<vmem>>, %arg2: memref<96x1xf32, #tpu.memory_space<vmem>>, %arg3: memref<96x1xf32, #tpu.memory_space<vmem>>, %arg4: memref<96x1xf32, #tpu.memory_space<vmem>>, %arg5: memref<2x32x32xf32, #tpu.memory_space<vmem>>, %arg6: memref<2x32x1xf32, #tpu.memory_space<vmem>>, %arg7: memref<1x32xf32, #tpu.memory_space<vmem>>, %arg8: memref<1x1xf32, #tpu.memory_space<vmem>>, %arg9: memref<9x1xf32, #tpu.memory_space<vmem>>, %arg10: memref<1x9xf32, #tpu.memory_space<vmem>>, %arg11: memref<2xf32, #tpu.memory_space<smem>>, %arg12: memref<1x512xf32, #tpu.memory_space<vmem>>) attributes {dimension_semantics = [#tpu.dimension_semantics<parallel>], iteration_bounds = array<i64: 2>, scalar_prefetch = 0 : i64, scratch_operands = 0 : i64, tpu.core_type = #tpu.core_type<tc>, window_params = [{transform_indices = @transform_0, window_bounds = array<i64: 2, 512>}, {pipeline_mode = #tpu.pipeline_mode<synchronous>, transform_indices = @transform_1, window_bounds = array<i64: 96, 1>}, {pipeline_mode = #tpu.pipeline_mode<synchronous>, transform_indices = @transform_2, window_bounds = array<i64: 96, 1>}, {pipeline_mode = #tpu.pipeline_mode<synchronous>, transform_indices = @transform_3, window_bounds = array<i64: 96, 1>}, {pipeline_mode = #tpu.pipeline_mode<synchronous>, transform_indices = @transform_4, window_bounds = array<i64: 2, 32, 32>}, {pipeline_mode = #tpu.pipeline_mode<synchronous>, transform_indices = @transform_5, window_bounds = array<i64: 2, 32, 1>}, {pipeline_mode = #tpu.pipeline_mode<synchronous>, transform_indices = @transform_6, window_bounds = array<i64: 1, 32>}, {pipeline_mode = #tpu.pipeline_mode<synchronous>, transform_indices = @transform_7, window_bounds = array<i64: 1, 1>}, {pipeline_mode = #tpu.pipeline_mode<synchronous>, transform_indices = @transform_8, window_bounds = array<i64: 9, 1>}, {pipeline_mode = #tpu.pipeline_mode<synchronous>, transform_indices = @transform_9, window_bounds = array<i64: 1, 9>}, {transform_indices = @transform_10, window_bounds = array<i64: 2>}, {transform_indices = @transform_11, window_bounds = array<i64: 1, 512>}]} {
    %c0 = arith.constant 0 : index
    %c0_0 = arith.constant 0 : index
    %0 = vector.load %arg1[%c0, %c0_0] : memref<2x512xf32, #tpu.memory_space<vmem>>, vector<2x512xf32>
    %1 = vector.extract_strided_slice %0 {offsets = [0, 0], sizes = [1, 512], strides = [1, 1]} : vector<2x512xf32> to vector<1x512xf32>
    %2 = vector.extract_strided_slice %0 {offsets = [1, 0], sizes = [1, 512], strides = [1, 1]} : vector<2x512xf32> to vector<1x512xf32>
    %c0_1 = arith.constant 0 : index
    %3 = memref.load %arg11[%c0_1] : memref<2xf32, #tpu.memory_space<smem>>
    %c1 = arith.constant 1 : index
    %4 = memref.load %arg11[%c1] : memref<2xf32, #tpu.memory_space<smem>>
    %cst = arith.constant 0.000000e+00 : f32
    %5 = arith.subf %cst, %3 : f32
    %6 = vector.broadcast %5 : f32 to vector<1x512xf32>
    %7 = arith.mulf %6, %2 : vector<1x512xf32>
    %8 = math.exp %7 : vector<1x512xf32>
    %cst_2 = arith.constant 1.000000e+00 : f32
    %9 = vector.broadcast %cst_2 : f32 to vector<1x512xf32>
    %10 = arith.subf %9, %8 : vector<1x512xf32>
    %cst_3 = arith.constant 1.000000e+00 : f32
    %11 = vector.broadcast %cst_3 : f32 to vector<1x512xf32>
    %12 = arith.subf %11, %1 : vector<1x512xf32>
    %13 = arith.mulf %1, %12 : vector<1x512xf32>
    %c0_4 = arith.constant 0 : index
    %c0_5 = arith.constant 0 : index
    %14 = vector.load %arg2[%c0_4, %c0_5] : memref<96x1xf32, #tpu.memory_space<vmem>>, vector<96x1xf32>
    %15 = vector.broadcast %14 : vector<96x1xf32> to vector<96x512xf32>
    %16 = vector.broadcast %1 : vector<1x512xf32> to vector<96x512xf32>
    %17 = arith.mulf %15, %16 : vector<96x512xf32>
    %c0_6 = arith.constant 0 : index
    %c0_7 = arith.constant 0 : index
    %18 = vector.load %arg3[%c0_6, %c0_7] : memref<96x1xf32, #tpu.memory_space<vmem>>, vector<96x1xf32>
    %19 = vector.broadcast %18 : vector<96x1xf32> to vector<96x512xf32>
    %20 = vector.broadcast %2 : vector<1x512xf32> to vector<96x512xf32>
    %21 = arith.mulf %19, %20 : vector<96x512xf32>
    %22 = arith.addf %17, %21 : vector<96x512xf32>
    %c0_8 = arith.constant 0 : index
    %c0_9 = arith.constant 0 : index
    %23 = vector.load %arg4[%c0_8, %c0_9] : memref<96x1xf32, #tpu.memory_space<vmem>>, vector<96x1xf32>
    %24 = vector.broadcast %23 : vector<96x1xf32> to vector<96x512xf32>
    %25 = arith.addf %22, %24 : vector<96x512xf32>
    %26 = math.tanh %25 : vector<96x512xf32>
    %27 = vector.extract_strided_slice %26 {offsets = [0, 0], sizes = [32, 512], strides = [1, 1]} : vector<96x512xf32> to vector<32x512xf32>
    %28 = vector.extract_strided_slice %26 {offsets = [32, 0], sizes = [32, 512], strides = [1, 1]} : vector<96x512xf32> to vector<32x512xf32>
    %29 = vector.extract_strided_slice %26 {offsets = [64, 0], sizes = [32, 512], strides = [1, 1]} : vector<96x512xf32> to vector<32x512xf32>
    %c0_10 = arith.constant 0 : index
    %c0_11 = arith.constant 0 : index
    %c0_12 = arith.constant 0 : index
    %30 = vector.load %arg5[%c0_10, %c0_11, %c0_12] : memref<2x32x32xf32, #tpu.memory_space<vmem>>, vector<1x32x32xf32>
    %31 = vector.shape_cast %30 : vector<1x32x32xf32> to vector<32x32xf32>
    %cst_13 = arith.constant dense<0.000000e+00> : vector<32x512xf32>
    %32 = tpu.matmul %31, %29, %cst_13 {dimension_numbers = #tpu.dot_dimension_numbers<[1], [0], [0], [1], [0, 0, 1, 1], [], []>} : vector<32x32xf32>, vector<32x512xf32>, vector<32x512xf32> -> vector<32x512xf32>
    %c0_14 = arith.constant 0 : index
    %c0_15 = arith.constant 0 : index
    %c0_16 = arith.constant 0 : index
    %33 = vector.load %arg6[%c0_14, %c0_15, %c0_16] : memref<2x32x1xf32, #tpu.memory_space<vmem>>, vector<1x32x1xf32>
    %34 = vector.shape_cast %33 : vector<1x32x1xf32> to vector<32x1xf32>
    %35 = vector.broadcast %34 : vector<32x1xf32> to vector<32x512xf32>
    %36 = arith.addf %32, %35 : vector<32x512xf32>
    %37 = math.tanh %36 : vector<32x512xf32>
    %cst_17 = arith.constant 1.000000e+00 : f32
    %38 = vector.broadcast %cst_17 : f32 to vector<32x512xf32>
    %39 = arith.subf %38, %37 : vector<32x512xf32>
    %40 = arith.mulf %39, %27 : vector<32x512xf32>
    %41 = arith.mulf %37, %28 : vector<32x512xf32>
    %42 = arith.addf %40, %41 : vector<32x512xf32>
    %c1_18 = arith.constant 1 : index
    %c0_19 = arith.constant 0 : index
    %c0_20 = arith.constant 0 : index
    %43 = vector.load %arg5[%c1_18, %c0_19, %c0_20] : memref<2x32x32xf32, #tpu.memory_space<vmem>>, vector<1x32x32xf32>
    %44 = vector.shape_cast %43 : vector<1x32x32xf32> to vector<32x32xf32>
    %cst_21 = arith.constant dense<0.000000e+00> : vector<32x512xf32>
    %45 = tpu.matmul %44, %42, %cst_21 {dimension_numbers = #tpu.dot_dimension_numbers<[1], [0], [0], [1], [0, 0, 1, 1], [], []>} : vector<32x32xf32>, vector<32x512xf32>, vector<32x512xf32> -> vector<32x512xf32>
    %c1_22 = arith.constant 1 : index
    %c0_23 = arith.constant 0 : index
    %c0_24 = arith.constant 0 : index
    %46 = vector.load %arg6[%c1_22, %c0_23, %c0_24] : memref<2x32x1xf32, #tpu.memory_space<vmem>>, vector<1x32x1xf32>
    %47 = vector.shape_cast %46 : vector<1x32x1xf32> to vector<32x1xf32>
    %48 = vector.broadcast %47 : vector<32x1xf32> to vector<32x512xf32>
    %49 = arith.addf %45, %48 : vector<32x512xf32>
    %50 = math.tanh %49 : vector<32x512xf32>
    %cst_25 = arith.constant 1.000000e+00 : f32
    %51 = vector.broadcast %cst_25 : f32 to vector<32x512xf32>
    %52 = arith.subf %51, %50 : vector<32x512xf32>
    %53 = arith.mulf %52, %27 : vector<32x512xf32>
    %54 = arith.mulf %50, %28 : vector<32x512xf32>
    %55 = arith.addf %53, %54 : vector<32x512xf32>
    %c0_26 = arith.constant 0 : index
    %c0_27 = arith.constant 0 : index
    %56 = vector.load %arg7[%c0_26, %c0_27] : memref<1x32xf32, #tpu.memory_space<vmem>>, vector<1x32xf32>
    %cst_28 = arith.constant dense<0.000000e+00> : vector<1x512xf32>
    %57 = tpu.matmul %56, %55, %cst_28 {dimension_numbers = #tpu.dot_dimension_numbers<[1], [0], [0], [1], [0, 0, 1, 1], [], []>} : vector<1x32xf32>, vector<32x512xf32>, vector<1x512xf32> -> vector<1x512xf32>
    %c0_29 = arith.constant 0 : index
    %c0_30 = arith.constant 0 : index
    %58 = vector.load %arg8[%c0_29, %c0_30] : memref<1x1xf32, #tpu.memory_space<vmem>>, vector<1x1xf32>
    %59 = vector.broadcast %58 : vector<1x1xf32> to vector<1x512xf32>
    %60 = arith.addf %57, %59 : vector<1x512xf32>
    %c0_31 = arith.constant 0 : index
    %c0_32 = arith.constant 0 : index
    %61 = vector.load %arg9[%c0_31, %c0_32] : memref<9x1xf32, #tpu.memory_space<vmem>>, vector<9x1xf32>
    %62 = vector.broadcast %1 : vector<1x512xf32> to vector<9x512xf32>
    %63 = vector.broadcast %61 : vector<9x1xf32> to vector<9x512xf32>
    %64 = arith.subf %62, %63 : vector<9x512xf32>
    %65 = arith.mulf %64, %64 : vector<9x512xf32>
    %cst_33 = arith.constant 0.000000e+00 : f32
    %66 = vector.broadcast %cst_33 : f32 to vector<9x512xf32>
    %67 = arith.subf %66, %65 : vector<9x512xf32>
    %68 = vector.broadcast %4 : f32 to vector<9x512xf32>
    %69 = arith.mulf %67, %68 : vector<9x512xf32>
    %70 = math.exp %69 : vector<9x512xf32>
    %c0_34 = arith.constant 0 : index
    %c0_35 = arith.constant 0 : index
    %71 = vector.load %arg10[%c0_34, %c0_35] : memref<1x9xf32, #tpu.memory_space<vmem>>, vector<1x9xf32>
    %cst_36 = arith.constant dense<0.000000e+00> : vector<1x512xf32>
    %72 = tpu.matmul %71, %70, %cst_36 {dimension_numbers = #tpu.dot_dimension_numbers<[1], [0], [0], [1], [0, 0, 1, 1], [], []>} : vector<1x9xf32>, vector<9x512xf32>, vector<1x512xf32> -> vector<1x512xf32>
    %73 = arith.mulf %10, %13 : vector<1x512xf32>
    %74 = arith.mulf %73, %60 : vector<1x512xf32>
    %75 = arith.addf %72, %74 : vector<1x512xf32>
    %c0_37 = arith.constant 0 : index
    %c0_38 = arith.constant 0 : index
    %76 = vector.load %arg12[%c0_37, %c0_38] : memref<1x512xf32, #tpu.memory_space<vmem>>, vector<1x512xf32>
    tpu.vector_store %arg12[%c0_37, %c0_38], %75 {strides = array<i32>} : memref<1x512xf32, #tpu.memory_space<vmem>>, vector<1x512xf32>,
    return
  }
  func.func @transform_0(%arg0: i32) -> (i32, i32) {
    %c0_i32 = arith.constant 0 : i32
    %c0_i32_0 = arith.constant 0 : i32
    return %c0_i32, %arg0 : i32, i32
  }
  func.func @transform_1(%arg0: i32) -> (i32, i32) {
    %c0_i32 = arith.constant 0 : i32
    %c0_i32_0 = arith.constant 0 : i32
    %c0_i32_1 = arith.constant 0 : i32
    return %c0_i32, %c0_i32_0 : i32, i32
  }
  func.func @transform_2(%arg0: i32) -> (i32, i32) {
    %c0_i32 = arith.constant 0 : i32
    %c0_i32_0 = arith.constant 0 : i32
    %c0_i32_1 = arith.constant 0 : i32
    return %c0_i32, %c0_i32_0 : i32, i32
  }
  func.func @transform_3(%arg0: i32) -> (i32, i32) {
    %c0_i32 = arith.constant 0 : i32
    %c0_i32_0 = arith.constant 0 : i32
    %c0_i32_1 = arith.constant 0 : i32
    return %c0_i32, %c0_i32_0 : i32, i32
  }
  func.func @transform_4(%arg0: i32) -> (i32, i32, i32) {
    %c0_i32 = arith.constant 0 : i32
    %c0_i32_0 = arith.constant 0 : i32
    %c0_i32_1 = arith.constant 0 : i32
    %c0_i32_2 = arith.constant 0 : i32
    return %c0_i32, %c0_i32_0, %c0_i32_1 : i32, i32, i32
  }
  func.func @transform_5(%arg0: i32) -> (i32, i32, i32) {
    %c0_i32 = arith.constant 0 : i32
    %c0_i32_0 = arith.constant 0 : i32
    %c0_i32_1 = arith.constant 0 : i32
    %c0_i32_2 = arith.constant 0 : i32
    return %c0_i32, %c0_i32_0, %c0_i32_1 : i32, i32, i32
  }
  func.func @transform_6(%arg0: i32) -> (i32, i32) {
    %c0_i32 = arith.constant 0 : i32
    %c0_i32_0 = arith.constant 0 : i32
    %c0_i32_1 = arith.constant 0 : i32
    return %c0_i32, %c0_i32_0 : i32, i32
  }
  func.func @transform_7(%arg0: i32) -> (i32, i32) {
    %c0_i32 = arith.constant 0 : i32
    %c0_i32_0 = arith.constant 0 : i32
    %c0_i32_1 = arith.constant 0 : i32
    return %c0_i32, %c0_i32_0 : i32, i32
  }
  func.func @transform_8(%arg0: i32) -> (i32, i32) {
    %c0_i32 = arith.constant 0 : i32
    %c0_i32_0 = arith.constant 0 : i32
    %c0_i32_1 = arith.constant 0 : i32
    return %c0_i32, %c0_i32_0 : i32, i32
  }
  func.func @transform_9(%arg0: i32) -> (i32, i32) {
    %c0_i32 = arith.constant 0 : i32
    %c0_i32_0 = arith.constant 0 : i32
    %c0_i32_1 = arith.constant 0 : i32
    return %c0_i32, %c0_i32_0 : i32, i32
  }
  func.func @transform_10(%arg0: i32) -> i32 {
    %c0_i32 = arith.constant 0 : i32
    %c0_i32_0 = arith.constant 0 : i32
    return %c0_i32 : i32
  }
  func.func @transform_11(%arg0: i32) -> (i32, i32) {
    %c0_i32 = arith.constant 0 : i32
    %c0_i32_0 = arith.constant 0 : i32
    return %c0_i32, %arg0 : i32, i32
  }
}

</mosaic_0001>

<llo_original>
// kernel: tpu_custom_call.1
$region0: #{tpu_custom_call.1}
  #allocation0 [shape = 'u32[]', space=smem, size = 0x4, offset = 0x4, fixed_abs, tag = 'smem constant byte address 0x4 - core index']
  #allocation1 [shape = 'u32[144,128]{1,0:T(1,128)}', space=vmem, size = 0x12000, scoped, tag = 'internal scratch']
  #allocation2 [shape = 'f32[1,1]{1,0:T(1,128)S(1)}', space=vmem, size = 0x200, scoped, tag = 'scoped memory for tpu_custom_call.1']
  %s0 = inlined_call_operand.vmem [shape: f32[2,1024], index: 0, kind: input, shape index: {}]
  %s1 = inlined_call_operand.vmem [shape: f32[96,1], index: 1, kind: input, shape index: {}]
  %s2 = inlined_call_operand.vmem [shape: f32[96,1], index: 2, kind: input, shape index: {}]
  %s3 = inlined_call_operand.vmem [shape: f32[96,1], index: 3, kind: input, shape index: {}]
  %s4 = inlined_call_operand.vmem [shape: f32[2,32,32], index: 4, kind: input, shape index: {}]
  %s5 = inlined_call_operand.vmem [shape: f32[2,32,1], index: 5, kind: input, shape index: {}]
  %s6 = inlined_call_operand.vmem [shape: f32[1,32], index: 6, kind: input, shape index: {}]
  %s7 = inlined_call_operand.<no memory space> [shape: f32[1,1], index: 7, kind: input, shape index: {}]
  %s8 = inlined_call_operand.vmem [shape: f32[9,1], index: 8, kind: input, shape index: {}]
  %s9 = inlined_call_operand.vmem [shape: f32[1,9], index: 9, kind: input, shape index: {}]
  %s10 = inlined_call_operand.vmem [shape: f32[2], index: 10, kind: input, shape index: {}]
  %s11 = inlined_call_operand.hbm [shape: f32[1,1024], index: 11, kind: output, shape index: {}]
  %s12 = sld [smem:[#allocation0]]
  $region81: #{tpu_custom_call.1} parent=0
    _
  %s14 = ssub.s32 1, %s12
  %s15 = scalar_select 0, %s14, %s12
  %v16 = vstv %s7
  %17 = vst [vmem:[#allocation2] sm:$0x1] %v16
  $region1: #{tpu_custom_call.1} parent=0
    #allocation3 [shape = 'u8[512]{0}', space=smem, size = 0x200, scoped, tag = 'input window, operand 10, single buffered']
    #allocation4 [shape = 's32[2]{0}', space=sflag, size = 0x8, scoped, tag = 'scoped memory for tpu_custom_call.1']
    #allocation5 [shape = 's32[2]{0}', space=sflag, size = 0x8, scoped, tag = 'scoped memory for tpu_custom_call.1']
    #allocation6 [shape = 'u8[4096]{0}', space=vmem, size = 0x1000, scoped, tag = 'output window, operand 0']
    %18 = vsyncpa [#allocation5], 0
    %19 = vsyncpa [#allocation4], 0
    %s20 = scalar_lea.sflag [#allocation4], 1
    %21 = vsyncpa %s20, 0
    loop: start=0, step=1, limit=4
    $region2: #{tpu_custom_call.1} parent=1 // loop_pre_header
      _
    $region3: #{tpu_custom_call.1} parent=1 // loop_header
      %s23 = sphi 0, %s27
      %p24 = scmp.ge.s32.totalorder %s23, 4
      %s33 = sphi 0, %s35
      %s36 = sphi 0, %s33
      %s37 = sphi 0, %s36
      %s53 = sphi 0, %s37
      %s57 = sphi 0, %s57
      %s59 = sphi 0, %s57
      %s60 = sphi 0, %s59
      %s74 = sphi 0, %s60
      %s78 = sphi 0, %s78
      %s80 = sphi 0, %s78
      %s81 = sphi 0, %s80
      %s95 = sphi 0, %s81
      %s99 = sphi 0, %s99
      %s101 = sphi 0, %s99
      %s102 = sphi 0, %s101
      %s116 = sphi 0, %s102
      %s120 = sphi 0, %s120
      %s122 = sphi 0, %s120
      %s123 = sphi 0, %s122
      %s137 = sphi 0, %s123
      %s141 = sphi 0, %s141
      %s143 = sphi 0, %s141
      %s144 = sphi 0, %s143
      %s158 = sphi 0, %s144
      %s162 = sphi 0, %s162
      %s164 = sphi 0, %s162
      %s165 = sphi 0, %s164
      %s179 = sphi 0, %s165
      %s183 = sphi 0, %s183
      %s185 = sphi 0, %s183
      %s186 = sphi 0, %s185
      %s200 = sphi 0, %s186
      %s204 = sphi 0, %s204
      %s206 = sphi 0, %s204
      %s207 = sphi 0, %s206
      %s221 = sphi 0, %s207
      %s225 = sphi 0, %s225
      %s227 = sphi 0, %s225
      %s228 = sphi 0, %s227
      %s242 = sphi 0, %s228
      %s246 = sphi 0, %s246
      %s248 = sphi 0, %s246
      %s249 = sphi 0, %s248
      %s263 = sphi 0, %s249
      %s269 = sphi 0, %s271
      %s272 = sphi 0, %s269
      %s273 = sphi 0, %s272
      %s289 = sphi 0, %s273
    $region4: #{tpu_custom_call.1} parent=1 // loop_header_branch
      %26 = sbr.rel (%p24) target = $region8
    $region5: #{tpu_custom_call.1} parent=1 // loop_body
      %s28 = ssub.s32 %s23, 1
      %s29 = ssub.s32 %s23, 2
      %s30 = sadd.s32 %s23, 1
      %s31 = ssub.s32 %s23, %s30
      %p32 = scmp.eq.s32.totalorder %s31, 0
      %s34 = sadd.s32 %s33, 1
      %s35 = scalar_select %p32, %s33, %s34
      %p38 = pneg %p32
      %p39 = scmp.eq.s32.totalorder %s23, 1
      %p40 = por %p38, %p39
      %p41 = scmp.ne.s32.totalorder %s33, %s36
      %p42 = scmp.eq.s32.totalorder %s23, 0
      %p43 = por %p41, %p42
      %p44 = scmp.ne.s32.totalorder %s33, %s36
      %p45 = scmp.eq.s32.totalorder %s28, 1
      %p46 = por %p44, %p45
      %p47 = scmp.ne.s32.totalorder %s36, %s37
      %p48 = scmp.eq.s32.totalorder %s28, 0
      %p49 = por %p47, %p48
      %p50 = scmp.ne.s32.totalorder %s36, %s37
      %p51 = scmp.eq.s32.totalorder %s29, 1
      %p52 = por %p50, %p51
      %p54 = scmp.ne.s32.totalorder %s37, %s53
      %p55 = scmp.eq.s32.totalorder %s29, 0
      %p56 = por %p54, %p55
      %s58 = sadd.s32 %s57, 1
      %p61 = scmp.eq.s32.totalorder %s23, 1
      %p62 = scmp.ne.s32.totalorder %s57, %s59
      %p63 = scmp.eq.s32.totalorder %s23, 0
      %p64 = por %p62, %p63
      %p65 = scmp.ne.s32.totalorder %s57, %s59
      %p66 = scmp.eq.s32.totalorder %s28, 1
      %p67 = por %p65, %p66
      %p68 = scmp.ne.s32.totalorder %s59, %s60
      %p69 = scmp.eq.s32.totalorder %s28, 0
      %p70 = por %p68, %p69
      %p71 = scmp.ne.s32.totalorder %s59, %s60
      %p72 = scmp.eq.s32.totalorder %s29, 1
      %p73 = por %p71, %p72
      %p75 = scmp.ne.s32.totalorder %s60, %s74
      %p76 = scmp.eq.s32.totalorder %s29, 0
      %p77 = por %p75, %p76
      %s79 = sadd.s32 %s78, 1
      %p82 = scmp.eq.s32.totalorder %s23, 1
      %p83 = scmp.ne.s32.totalorder %s78, %s80
      %p84 = scmp.eq.s32.totalorder %s23, 0
      %p85 = por %p83, %p84
      %p86 = scmp.ne.s32.totalorder %s78, %s80
      %p87 = scmp.eq.s32.totalorder %s28, 1
      %p88 = por %p86, %p87
      %p89 = scmp.ne.s32.totalorder %s80, %s81
      %p90 = scmp.eq.s32.totalorder %s28, 0
      %p91 = por %p89, %p90
      %p92 = scmp.ne.s32.totalorder %s80, %s81
      %p93 = scmp.eq.s32.totalorder %s29, 1
      %p94 = por %p92, %p93
      %p96 = scmp.ne.s32.totalorder %s81, %s95
      %p97 = scmp.eq.s32.totalorder %s29, 0
      %p98 = por %p96, %p97
      %s100 = sadd.s32 %s99, 1
      %p103 = scmp.eq.s32.totalorder %s23, 1
      %p104 = scmp.ne.s32.totalorder %s99, %s101
      %p105 = scmp.eq.s32.totalorder %s23, 0
      %p106 = por %p104, %p105
      %p107 = scmp.ne.s32.totalorder %s99, %s101
      %p108 = scmp.eq.s32.totalorder %s28, 1
      %p109 = por %p107, %p108
      %p110 = scmp.ne.s32.totalorder %s101, %s102
      %p111 = scmp.eq.s32.totalorder %s28, 0
      %p112 = por %p110, %p111
      %p113 = scmp.ne.s32.totalorder %s101, %s102
      %p114 = scmp.eq.s32.totalorder %s29, 1
      %p115 = por %p113, %p114
      %p117 = scmp.ne.s32.totalorder %s102, %s116
      %p118 = scmp.eq.s32.totalorder %s29, 0
      %p119 = por %p117, %p118
      %s121 = sadd.s32 %s120, 1
      %p124 = scmp.eq.s32.totalorder %s23, 1
      %p125 = scmp.ne.s32.totalorder %s120, %s122
      %p126 = scmp.eq.s32.totalorder %s23, 0
      %p127 = por %p125, %p126
      %p128 = scmp.ne.s32.totalorder %s120, %s122
      %p129 = scmp.eq.s32.totalorder %s28, 1
      %p130 = por %p128, %p129
      %p131 = scmp.ne.s32.totalorder %s122, %s123
      %p132 = scmp.eq.s32.totalorder %s28, 0
      %p133 = por %p131, %p132
      %p134 = scmp.ne.s32.totalorder %s122, %s123
      %p135 = scmp.eq.s32.totalorder %s29, 1
      %p136 = por %p134, %p135
      %p138 = scmp.ne.s32.totalorder %s123, %s137
      %p139 = scmp.eq.s32.totalorder %s29, 0
      %p140 = por %p138, %p139
      %s142 = sadd.s32 %s141, 1
      %p145 = scmp.eq.s32.totalorder %s23, 1
      %p146 = scmp.ne.s32.totalorder %s141, %s143
      %p147 = scmp.eq.s32.totalorder %s23, 0
      %p148 = por %p146, %p147
      %p149 = scmp.ne.s32.totalorder %s141, %s143
      %p150 = scmp.eq.s32.totalorder %s28, 1
      %p151 = por %p149, %p150
      %p152 = scmp.ne.s32.totalorder %s143, %s144
      %p153 = scmp.eq.s32.totalorder %s28, 0
      %p154 = por %p152, %p153
      %p155 = scmp.ne.s32.totalorder %s143, %s144
      %p156 = scmp.eq.s32.totalorder %s29, 1
      %p157 = por %p155, %p156
      %p159 = scmp.ne.s32.totalorder %s144, %s158
      %p160 = scmp.eq.s32.totalorder %s29, 0
      %p161 = por %p159, %p160
      %s163 = sadd.s32 %s162, 1
      %p166 = scmp.eq.s32.totalorder %s23, 1
      %p167 = scmp.ne.s32.totalorder %s162, %s164
      %p168 = scmp.eq.s32.totalorder %s23, 0
      %p169 = por %p167, %p168
      %p170 = scmp.ne.s32.totalorder %s162, %s164
      %p171 = scmp.eq.s32.totalorder %s28, 1
      %p172 = por %p170, %p171
      %p173 = scmp.ne.s32.totalorder %s164, %s165
      %p174 = scmp.eq.s32.totalorder %s28, 0
      %p175 = por %p173, %p174
      %p176 = scmp.ne.s32.totalorder %s164, %s165
      %p177 = scmp.eq.s32.totalorder %s29, 1
      %p178 = por %p176, %p177
      %p180 = scmp.ne.s32.totalorder %s165, %s179
      %p181 = scmp.eq.s32.totalorder %s29, 0
      %p182 = por %p180, %p181
      %s184 = sadd.s32 %s183, 1
      %p187 = scmp.eq.s32.totalorder %s23, 1
      %p188 = scmp.ne.s32.totalorder %s183, %s185
      %p189 = scmp.eq.s32.totalorder %s23, 0
      %p190 = por %p188, %p189
      %p191 = scmp.ne.s32.totalorder %s183, %s185
      %p192 = scmp.eq.s32.totalorder %s28, 1
      %p193 = por %p191, %p192
      %p194 = scmp.ne.s32.totalorder %s185, %s186
      %p195 = scmp.eq.s32.totalorder %s28, 0
      %p196 = por %p194, %p195
      %p197 = scmp.ne.s32.totalorder %s185, %s186
      %p198 = scmp.eq.s32.totalorder %s29, 1
      %p199 = por %p197, %p198
      %p201 = scmp.ne.s32.totalorder %s186, %s200
      %p202 = scmp.eq.s32.totalorder %s29, 0
      %p203 = por %p201, %p202
      %s205 = sadd.s32 %s204, 1
      %p208 = scmp.eq.s32.totalorder %s23, 1
      %p209 = scmp.ne.s32.totalorder %s204, %s206
      %p210 = scmp.eq.s32.totalorder %s23, 0
      %p211 = por %p209, %p210
      %p212 = scmp.ne.s32.totalorder %s204, %s206
      %p213 = scmp.eq.s32.totalorder %s28, 1
      %p214 = por %p212, %p213
      %p215 = scmp.ne.s32.totalorder %s206, %s207
      %p216 = scmp.eq.s32.totalorder %s28, 0
      %p217 = por %p215, %p216
      %p218 = scmp.ne.s32.totalorder %s206, %s207
      %p219 = scmp.eq.s32.totalorder %s29, 1
      %p220 = por %p218, %p219
      %p222 = scmp.ne.s32.totalorder %s207, %s221
      %p223 = scmp.eq.s32.totalorder %s29, 0
      %p224 = por %p222, %p223
      %s226 = sadd.s32 %s225, 1
      %p229 = scmp.eq.s32.totalorder %s23, 1
      %p230 = scmp.ne.s32.totalorder %s225, %s227
      %p231 = scmp.eq.s32.totalorder %s23, 0
      %p232 = por %p230, %p231
      %p233 = scmp.ne.s32.totalorder %s225, %s227
      %p234 = scmp.eq.s32.totalorder %s28, 1
      %p235 = por %p233, %p234
      %p236 = scmp.ne.s32.totalorder %s227, %s228
      %p237 = scmp.eq.s32.totalorder %s28, 0
      %p238 = por %p236, %p237
      %p239 = scmp.ne.s32.totalorder %s227, %s228
      %p240 = scmp.eq.s32.totalorder %s29, 1
      %p241 = por %p239, %p240
      %p243 = scmp.ne.s32.totalorder %s228, %s242
      %p244 = scmp.eq.s32.totalorder %s29, 0
      %p245 = por %p243, %p244
      %s247 = sadd.s32 %s246, 1
      %p250 = scmp.eq.s32.totalorder %s23, 1
      %p251 = scmp.ne.s32.totalorder %s246, %s248
      %p252 = scmp.eq.s32.totalorder %s23, 0
      %p253 = por %p251, %p252
      %p254 = scmp.ne.s32.totalorder %s246, %s248
      %p255 = scmp.eq.s32.totalorder %s28, 1
      %p256 = por %p254, %p255
      %p257 = scmp.ne.s32.totalorder %s248, %s249
      %p258 = scmp.eq.s32.totalorder %s28, 0
      %p259 = por %p257, %p258
      %p260 = scmp.ne.s32.totalorder %s248, %s249
      %p261 = scmp.eq.s32.totalorder %s29, 1
      %p262 = por %p260, %p261
      %p264 = scmp.ne.s32.totalorder %s249, %s263
      %p265 = scmp.eq.s32.totalorder %s29, 0
      %p266 = por %p264, %p265
      %s267 = ssub.s32 %s23, %s30
      %p268 = scmp.eq.s32.totalorder %s267, 0
      %s270 = sadd.s32 %s269, 1
      %s271 = scalar_select %p268, %s269, %s270
      %p274 = pneg %p268
      %p275 = scmp.eq.s32.totalorder %s23, 1
      %p276 = por %p274, %p275
      %p277 = scmp.ne.s32.totalorder %s269, %s272
      %p278 = scmp.eq.s32.totalorder %s23, 0
      %p279 = por %p277, %p278
      %p280 = scmp.ne.s32.totalorder %s269, %s272
      %p281 = scmp.eq.s32.totalorder %s28, 1
      %p282 = por %p280, %p281
      %p283 = scmp.ne.s32.totalorder %s272, %s273
      %p284 = scmp.eq.s32.totalorder %s28, 0
      %p285 = por %p283, %p284
      %p286 = scmp.ne.s32.totalorder %s272, %s273
      %p287 = scmp.eq.s32.totalorder %s29, 1
      %p288 = por %p286, %p287
      %p290 = scmp.ne.s32.totalorder %s273, %s289
      %p291 = scmp.eq.s32.totalorder %s29, 0
      %p292 = por %p290, %p291
      %p293 = scmp.le.s32.totalorder 1, %s23
      %p294 = scmp.lt.s32.totalorder %s23, 3
      %p295 = pnand %p293, %p294
      %p296 = pneg %p295
      // Predicated region
      $region9: #{tpu_custom_call.1} parent=5 // pred_check
        _
      $region10: #{tpu_custom_call.1} parent=5 // pred_check_branch
        %298 = sbr.rel (%p295) target = $region12
      $region11: #{tpu_custom_call.1} parent=5 // pred_region
        %s299 = ssub.s32 %s23, 1
        // Predicated region
        $region13: #{tpu_custom_call.1} parent=11 // pred_check
          %p300 = pneg %p70
        $region14: #{tpu_custom_call.1} parent=11 // pred_check_branch
          %302 = sbr.rel (%p300) target = $region16
        $region15: #{tpu_custom_call.1} parent=11 // pred_region
          _
        $region16: #{tpu_custom_call.1} parent=11 // pred_fallthru
          _
        // Predicated region
        $region17: #{tpu_custom_call.1} parent=11 // pred_check
          %p303 = pneg %p91
        $region18: #{tpu_custom_call.1} parent=11 // pred_check_branch
          %305 = sbr.rel (%p303) target = $region20
        $region19: #{tpu_custom_call.1} parent=11 // pred_region
          _
        $region20: #{tpu_custom_call.1} parent=11 // pred_fallthru
          _
        // Predicated region
        $region21: #{tpu_custom_call.1} parent=11 // pred_check
          %p306 = pneg %p112
        $region22: #{tpu_custom_call.1} parent=11 // pred_check_branch
          %308 = sbr.rel (%p306) target = $region24
        $region23: #{tpu_custom_call.1} parent=11 // pred_region
          _
        $region24: #{tpu_custom_call.1} parent=11 // pred_fallthru
          _
        // Predicated region
        $region25: #{tpu_custom_call.1} parent=11 // pred_check
          %p309 = pneg %p133
        $region26: #{tpu_custom_call.1} parent=11 // pred_check_branch
          %311 = sbr.rel (%p309) target = $region28
        $region27: #{tpu_custom_call.1} parent=11 // pred_region
          _
        $region28: #{tpu_custom_call.1} parent=11 // pred_fallthru
          _
        // Predicated region
        $region29: #{tpu_custom_call.1} parent=11 // pred_check
          %p312 = pneg %p154
        $region30: #{tpu_custom_call.1} parent=11 // pred_check_branch
          %314 = sbr.rel (%p312) target = $region32
        $region31: #{tpu_custom_call.1} parent=11 // pred_region
          _
        $region32: #{tpu_custom_call.1} parent=11 // pred_fallthru
          _
        // Predicated region
        $region33: #{tpu_custom_call.1} parent=11 // pred_check
          %p315 = pneg %p175
        $region34: #{tpu_custom_call.1} parent=11 // pred_check_branch
          %317 = sbr.rel (%p315) target = $region36
        $region35: #{tpu_custom_call.1} parent=11 // pred_region
          _
        $region36: #{tpu_custom_call.1} parent=11 // pred_fallthru
          _
        // Predicated region
        $region37: #{tpu_custom_call.1} parent=11 // pred_check
          %p318 = pneg %p196
        $region38: #{tpu_custom_call.1} parent=11 // pred_check_branch
          %320 = sbr.rel (%p318) target = $region40
        $region39: #{tpu_custom_call.1} parent=11 // pred_region
          _
        $region40: #{tpu_custom_call.1} parent=11 // pred_fallthru
          _
        // Predicated region
        $region41: #{tpu_custom_call.1} parent=11 // pred_check
          %p321 = pneg %p217
        $region42: #{tpu_custom_call.1} parent=11 // pred_check_branch
          %323 = sbr.rel (%p321) target = $region44
        $region43: #{tpu_custom_call.1} parent=11 // pred_region
          _
        $region44: #{tpu_custom_call.1} parent=11 // pred_fallthru
          _
        // Predicated region
        $region45: #{tpu_custom_call.1} parent=11 // pred_check
          %p324 = pneg %p238
        $region46: #{tpu_custom_call.1} parent=11 // pred_check_branch
          %326 = sbr.rel (%p324) target = $region48
        $region47: #{tpu_custom_call.1} parent=11 // pred_region
          _
        $region48: #{tpu_custom_call.1} parent=11 // pred_fallthru
          _
        // Predicated region
        $region49: #{tpu_custom_call.1} parent=11 // pred_check
          %p327 = pneg %p259
        $region50: #{tpu_custom_call.1} parent=11 // pred_check_branch
          %329 = sbr.rel (%p327) target = $region52
        $region51: #{tpu_custom_call.1} parent=11 // pred_region
          %s331 = ssub.s32 16, 16
          %332 = vsyncadd [#allocation5], %s331
          %s334 = sshll.u32 %s10, 4
          %s335 = int_to_ptr.vmem [resolvable:$true] %s334
          %337 = dma.vmem_to_smem %s335, 16, [#allocation3], [#allocation5]
        $region52: #{tpu_custom_call.1} parent=11 // pred_fallthru
          _
      $region12: #{tpu_custom_call.1} parent=5 // pred_fallthru
        _
      %p338 = scmp.lt.s32.totalorder %s23, 2
      // Predicated region
      $region53: #{tpu_custom_call.1} parent=5 // pred_check
        %p339 = pneg %p338
      $region54: #{tpu_custom_call.1} parent=5 // pred_check_branch
        %341 = sbr.rel (%p339) target = $region56
      $region55: #{tpu_custom_call.1} parent=5 // pred_region
        // Predicated region
        $region57: #{tpu_custom_call.1} parent=55 // pred_check
          %p342 = pneg %p43
        $region58: #{tpu_custom_call.1} parent=55 // pred_check_branch
          %344 = sbr.rel (%p342) target = $region60
        $region59: #{tpu_custom_call.1} parent=55 // pred_region
          %s345 = smul.u32 4, %s23
          %p346 = scmp.lt.s32.totalorder %s345, 7
          %s347 = scalar_select %p346, %s345, 7
          %s348 = smul.addr %s347, 2
          %s349 = scalar_lea.vmem %s0, %s348
          %s350 = smul.u32 4, %s23
        $region60: #{tpu_custom_call.1} parent=55 // pred_fallthru
          _
      $region56: #{tpu_custom_call.1} parent=5 // pred_fallthru
        _
      %p351 = scmp.le.s32.totalorder 1, %s23
      %p352 = scmp.lt.s32.totalorder %s23, 3
      %p353 = pnand %p351, %p352
      %p354 = pneg %p353
      // Predicated region
      $region61: #{tpu_custom_call.1} parent=5 // pred_check
        _
      $region62: #{tpu_custom_call.1} parent=5 // pred_check_branch
        %356 = sbr.rel (%p353) target = $region64
      $region63: #{tpu_custom_call.1} parent=5 // pred_region
        %s357 = ssub.s32 %s23, 1
        // Predicated region
        $region65: #{tpu_custom_call.1} parent=63 // pred_check
          %p358 = pneg %p259
        $region66: #{tpu_custom_call.1} parent=63 // pred_check_branch
          %360 = sbr.rel (%p358) target = $region68
        $region67: #{tpu_custom_call.1} parent=63 // pred_region
          %361 = dma.done [#allocation5], 16
        $region68: #{tpu_custom_call.1} parent=63 // pred_fallthru
          _
        %362 = sfence
        %s363 = smul.u32 4, %s28
        %p364 = scmp.lt.s32.totalorder %s363, 7
        %s365 = scalar_select %p364, %s363, 7
        %s366 = smul.addr %s365, 2
        %s367 = scalar_lea.vmem %s0, %s366
        %p368 = pneg %p49
        %p369 = pneg %p46
        %p370 = pneg %p70
        %p371 = pneg %p67
        %p372 = pneg %p91
        %p373 = pneg %p88
        %p374 = pneg %p112
        %p375 = pneg %p109
        %p376 = pneg %p133
        %p377 = pneg %p130
        %p378 = pneg %p154
        %p379 = pneg %p151
        %p380 = pneg %p175
        %p381 = pneg %p172
        %p382 = pneg %p196
        %p383 = pneg %p193
        %p384 = pneg %p217
        %p385 = pneg %p214
        %p386 = pneg %p238
        %p387 = pneg %p235
        %p388 = pneg %p259
        %p389 = pneg %p256
        %p390 = pneg %p285
        %p391 = pneg %p282
        %s392 = sand.u32 %s272, 1
        %s393 = scalar_lea.sflag [#allocation4], %s392
        %s394 = sand.u32 %s272, 1
        %s395 = smul.addr %s394, 4
        %s396 = scalar_lea.vmem [#allocation6], %s395
        %s397 = smul.u32 4, %s28
        %p398 = scmp.lt.s32.totalorder %s397, 7
        %s399 = scalar_select %p398, %s397, 7
        %s400 = smul.addr %s399, 2
        %s401 = scalar_lea.vmem %s0, %s400
        %s402 = smul.u32 4, %s28
        %s403 = smul.u32 4, %s28
        %v404 = vld [vmem:[%s401] sm:$0xff]
        %s405 = sld [smem:[#allocation3]]
        %s406 = sld [smem:[#allocation3 + $0x1]]
        %s407 = ssub.f32 0.0, %s405
        %v408 = vstv %s407
        %v409 = vmul.f32 %v408, %v404
        %v410 = vmul.f32 %v409, 1.442695
        %v411 = vpow.pop %v410
        %v412 = vsub.f32 1.0, %v411
        %v413 = vsub.f32 1.0, %v404
        %v414 = vmul.f32 %v404, %v413
        %v415 = vld [vmem:[%s1] sm:$0xff]
        %v416 = vld [vmem:[%s1 + $0x8] sm:$0xff]
        %v417 = vld [vmem:[%s1 + $0x10] sm:$0xff]
        %v418 = vld [vmem:[%s1 + $0x18] sm:$0xff]
        %v419 = vld [vmem:[%s1 + $0x20] sm:$0xff]
        %v420 = vld [vmem:[%s1 + $0x28] sm:$0xff]
        %v421 = vld [vmem:[%s1 + $0x30] sm:$0xff]
        %v422 = vld [vmem:[%s1 + $0x38] sm:$0xff]
        %v423 = vld [vmem:[%s1 + $0x40] sm:$0xff]
        %v424 = vld [vmem:[%s1 + $0x48] sm:$0xff]
        %v425 = vld [vmem:[%s1 + $0x50] sm:$0xff]
        %v426 = vld [vmem:[%s1 + $0x58] sm:$0xff]
        %428 = vset.pattern.permute.xlu0 0
        %429 = vperm.xlu0 %428, %v415
        %v430 = vpop.permute.xlu0 %429
        %433 = vset.pattern.permute.xlu0 0
        %434 = vperm.xlu0 %433, %v416
        %v435 = vpop.permute.xlu0 %434
        %438 = vset.pattern.permute.xlu0 0
        %439 = vperm.xlu0 %438, %v417
        %v440 = vpop.permute.xlu0 %439
        %443 = vset.pattern.permute.xlu0 0
        %444 = vperm.xlu0 %443, %v418
        %v445 = vpop.permute.xlu0 %444
        %448 = vset.pattern.permute.xlu0 0
        %449 = vperm.xlu0 %448, %v419
        %v450 = vpop.permute.xlu0 %449
        %453 = vset.pattern.permute.xlu0 0
        %454 = vperm.xlu0 %453, %v420
        %v455 = vpop.permute.xlu0 %454
        %458 = vset.pattern.permute.xlu0 0
        %459 = vperm.xlu0 %458, %v421
        %v460 = vpop.permute.xlu0 %459
        %463 = vset.pattern.permute.xlu0 0
        %464 = vperm.xlu0 %463, %v422
        %v465 = vpop.permute.xlu0 %464
        %468 = vset.pattern.permute.xlu0 0
        %469 = vperm.xlu0 %468, %v423
        %v470 = vpop.permute.xlu0 %469
        %473 = vset.pattern.permute.xlu0 0
        %474 = vperm.xlu0 %473, %v424
        %v475 = vpop.permute.xlu0 %474
        %478 = vset.pattern.permute.xlu0 0
        %479 = vperm.xlu0 %478, %v425
        %v480 = vpop.permute.xlu0 %479
        %483 = vset.pattern.permute.xlu0 0
        %484 = vperm.xlu0 %483, %v426
        %v485 = vpop.permute.xlu0 %484
        %v488 = vlaneseq
        %v489 = vshrl.u32 %v488, 7
        %v490 = vsub.s32 0, %v489
        %v491 = vrot.slane %v404, %v490
        %v492 = vlaneseq
        %v493 = vshrl.u32 %v492, 7
        %v494 = vsub.s32 2, %v493
        %v495 = vrot.slane %v404, %v494
        %v496 = vlaneseq
        %v497 = vshrl.u32 %v496, 7
        %v498 = vsub.s32 4, %v497
        %v499 = vrot.slane %v404, %v498
        %v500 = vlaneseq
        %v501 = vshrl.u32 %v500, 7
        %v502 = vsub.s32 6, %v501
        %v503 = vrot.slane %v404, %v502
        %v508 = vlaneseq
        %v509 = vshrl.u32 %v508, 7
        %v510 = vsub.s32 0, %v509
        %v511 = vrot.slane %v491, %v510
        %v512 = vlaneseq
        %v513 = vshrl.u32 %v512, 7
        %v514 = vsub.s32 0, %v513
        %v515 = vrot.slane %v495, %v514
        %v516 = vlaneseq
        %v517 = vshrl.u32 %v516, 7
        %v518 = vsub.s32 0, %v517
        %v519 = vrot.slane %v499, %v518
        %v520 = vlaneseq
        %v521 = vshrl.u32 %v520, 7
        %v522 = vsub.s32 0, %v521
        %v523 = vrot.slane %v503, %v522
        %v524 = vmul.f32 %v430, %v511
        %v525 = vmul.f32 %v430, %v515
        %v526 = vmul.f32 %v430, %v519
        %v527 = vmul.f32 %v430, %v523
        %v528 = vmul.f32 %v435, %v511
        %v529 = vmul.f32 %v435, %v515
        %v530 = vmul.f32 %v435, %v519
        %v531 = vmul.f32 %v435, %v523
        %v532 = vmul.f32 %v440, %v511
        %v533 = vmul.f32 %v440, %v515
        %v534 = vmul.f32 %v440, %v519
        %v535 = vmul.f32 %v440, %v523
        %v536 = vmul.f32 %v445, %v511
        %v537 = vmul.f32 %v445, %v515
        %v538 = vmul.f32 %v445, %v519
        %v539 = vmul.f32 %v445, %v523
        %v540 = vmul.f32 %v450, %v511
        %v541 = vmul.f32 %v450, %v515
        %v542 = vmul.f32 %v450, %v519
        %v543 = vmul.f32 %v450, %v523
        %v544 = vmul.f32 %v455, %v511
        %v545 = vmul.f32 %v455, %v515
        %v546 = vmul.f32 %v455, %v519
        %v547 = vmul.f32 %v455, %v523
        %v548 = vmul.f32 %v460, %v511
        %v549 = vmul.f32 %v460, %v515
        %v550 = vmul.f32 %v460, %v519
        %v551 = vmul.f32 %v460, %v523
        %v552 = vmul.f32 %v465, %v511
        %v553 = vmul.f32 %v465, %v515
        %v554 = vmul.f32 %v465, %v519
        %v555 = vmul.f32 %v465, %v523
        %v556 = vmul.f32 %v470, %v511
        %v557 = vmul.f32 %v470, %v515
        %v558 = vmul.f32 %v470, %v519
        %v559 = vmul.f32 %v470, %v523
        %v560 = vmul.f32 %v475, %v511
        %v561 = vmul.f32 %v475, %v515
        %v562 = vmul.f32 %v475, %v519
        %v563 = vmul.f32 %v475, %v523
        %v564 = vmul.f32 %v480, %v511
        %v565 = vmul.f32 %v480, %v515
        %v566 = vmul.f32 %v480, %v519
        %v567 = vmul.f32 %v480, %v523
        %v568 = vmul.f32 %v485, %v511
        %v569 = vmul.f32 %v485, %v515
        %v570 = vmul.f32 %v485, %v519
        %v571 = vmul.f32 %v485, %v523
        %v572 = vld [vmem:[%s2] sm:$0xff]
        %v573 = vld [vmem:[%s2 + $0x8] sm:$0xff]
        %v574 = vld [vmem:[%s2 + $0x10] sm:$0xff]
        %v575 = vld [vmem:[%s2 + $0x18] sm:$0xff]
        %v576 = vld [vmem:[%s2 + $0x20] sm:$0xff]
        %v577 = vld [vmem:[%s2 + $0x28] sm:$0xff]
        %v578 = vld [vmem:[%s2 + $0x30] sm:$0xff]
        %v579 = vld [vmem:[%s2 + $0x38] sm:$0xff]
        %v580 = vld [vmem:[%s2 + $0x40] sm:$0xff]
        %v581 = vld [vmem:[%s2 + $0x48] sm:$0xff]
        %v582 = vld [vmem:[%s2 + $0x50] sm:$0xff]
        %v583 = vld [vmem:[%s2 + $0x58] sm:$0xff]
        %585 = vset.pattern.permute.xlu0 0
        %586 = vperm.xlu0 %585, %v572
        %v587 = vpop.permute.xlu0 %586
        %590 = vset.pattern.permute.xlu0 0
        %591 = vperm.xlu0 %590, %v573
        %v592 = vpop.permute.xlu0 %591
        %595 = vset.pattern.permute.xlu0 0
        %596 = vperm.xlu0 %595, %v574
        %v597 = vpop.permute.xlu0 %596
        %600 = vset.pattern.permute.xlu0 0
        %601 = vperm.xlu0 %600, %v575
        %v602 = vpop.permute.xlu0 %601
        %605 = vset.pattern.permute.xlu0 0
        %606 = vperm.xlu0 %605, %v576
        %v607 = vpop.permute.xlu0 %606
        %610 = vset.pattern.permute.xlu0 0
        %611 = vperm.xlu0 %610, %v577
        %v612 = vpop.permute.xlu0 %611
        %615 = vset.pattern.permute.xlu0 0
        %616 = vperm.xlu0 %615, %v578
        %v617 = vpop.permute.xlu0 %616
        %620 = vset.pattern.permute.xlu0 0
        %621 = vperm.xlu0 %620, %v579
        %v622 = vpop.permute.xlu0 %621
        %625 = vset.pattern.permute.xlu0 0
        %626 = vperm.xlu0 %625, %v580
        %v627 = vpop.permute.xlu0 %626
        %630 = vset.pattern.permute.xlu0 0
        %631 = vperm.xlu0 %630, %v581
        %v632 = vpop.permute.xlu0 %631
        %635 = vset.pattern.permute.xlu0 0
        %636 = vperm.xlu0 %635, %v582
        %v637 = vpop.permute.xlu0 %636
        %640 = vset.pattern.permute.xlu0 0
        %641 = vperm.xlu0 %640, %v583
        %v642 = vpop.permute.xlu0 %641
        %v644 = vlaneseq
        %v645 = vshrl.u32 %v644, 7
        %v646 = vsub.s32 1, %v645
        %v647 = vrot.slane %v404, %v646
        %v648 = vlaneseq
        %v649 = vshrl.u32 %v648, 7
        %v650 = vsub.s32 3, %v649
        %v651 = vrot.slane %v404, %v650
        %v652 = vlaneseq
        %v653 = vshrl.u32 %v652, 7
        %v654 = vsub.s32 5, %v653
        %v655 = vrot.slane %v404, %v654
        %v656 = vlaneseq
        %v657 = vshrl.u32 %v656, 7
        %v658 = vsub.s32 7, %v657
        %v659 = vrot.slane %v404, %v658
        %v664 = vlaneseq
        %v665 = vshrl.u32 %v664, 7
        %v666 = vsub.s32 1, %v665
        %v667 = vrot.slane %v647, %v666
        %v668 = vlaneseq
        %v669 = vshrl.u32 %v668, 7
        %v670 = vsub.s32 1, %v669
        %v671 = vrot.slane %v651, %v670
        %v672 = vlaneseq
        %v673 = vshrl.u32 %v672, 7
        %v674 = vsub.s32 1, %v673
        %v675 = vrot.slane %v655, %v674
        %v676 = vlaneseq
        %v677 = vshrl.u32 %v676, 7
        %v678 = vsub.s32 1, %v677
        %v679 = vrot.slane %v659, %v678
        %v680 = vmul.f32 %v587, %v667
        %v681 = vmul.f32 %v587, %v671
        %v682 = vmul.f32 %v587, %v675
        %v683 = vmul.f32 %v587, %v679
        %v684 = vmul.f32 %v592, %v667
        %v685 = vmul.f32 %v592, %v671
        %v686 = vmul.f32 %v592, %v675
        %v687 = vmul.f32 %v592, %v679
        %v688 = vmul.f32 %v597, %v667
        %v689 = vmul.f32 %v597, %v671
        %v690 = vmul.f32 %v597, %v675
        %v691 = vmul.f32 %v597, %v679
        %v692 = vmul.f32 %v602, %v667
        %v693 = vmul.f32 %v602, %v671
        %v694 = vmul.f32 %v602, %v675
        %v695 = vmul.f32 %v602, %v679
        %v696 = vmul.f32 %v607, %v667
        %v697 = vmul.f32 %v607, %v671
        %v698 = vmul.f32 %v607, %v675
        %v699 = vmul.f32 %v607, %v679
        %v700 = vmul.f32 %v612, %v667
        %v701 = vmul.f32 %v612, %v671
        %v702 = vmul.f32 %v612, %v675
        %v703 = vmul.f32 %v612, %v679
        %v704 = vmul.f32 %v617, %v667
        %v705 = vmul.f32 %v617, %v671
        %v706 = vmul.f32 %v617, %v675
        %v707 = vmul.f32 %v617, %v679
        %v708 = vmul.f32 %v622, %v667
        %v709 = vmul.f32 %v622, %v671
        %v710 = vmul.f32 %v622, %v675
        %v711 = vmul.f32 %v622, %v679
        %v712 = vmul.f32 %v627, %v667
        %v713 = vmul.f32 %v627, %v671
        %v714 = vmul.f32 %v627, %v675
        %v715 = vmul.f32 %v627, %v679
        %v716 = vmul.f32 %v632, %v667
        %v717 = vmul.f32 %v632, %v671
        %v718 = vmul.f32 %v632, %v675
        %v719 = vmul.f32 %v632, %v679
        %v720 = vmul.f32 %v637, %v667
        %v721 = vmul.f32 %v637, %v671
        %v722 = vmul.f32 %v637, %v675
        %v723 = vmul.f32 %v637, %v679
        %v724 = vmul.f32 %v642, %v667
        %v725 = vmul.f32 %v642, %v671
        %v726 = vmul.f32 %v642, %v675
        %v727 = vmul.f32 %v642, %v679
        %v728 = vadd.f32 %v524, %v680
        %v729 = vadd.f32 %v525, %v681
        %v730 = vadd.f32 %v526, %v682
        %v731 = vadd.f32 %v527, %v683
        %v732 = vadd.f32 %v528, %v684
        %v733 = vadd.f32 %v529, %v685
        %v734 = vadd.f32 %v530, %v686
        %v735 = vadd.f32 %v531, %v687
        %v736 = vadd.f32 %v532, %v688
        %v737 = vadd.f32 %v533, %v689
        %v738 = vadd.f32 %v534, %v690
        %v739 = vadd.f32 %v535, %v691
        %v740 = vadd.f32 %v536, %v692
        %v741 = vadd.f32 %v537, %v693
        %v742 = vadd.f32 %v538, %v694
        %v743 = vadd.f32 %v539, %v695
        %v744 = vadd.f32 %v540, %v696
        %v745 = vadd.f32 %v541, %v697
        %v746 = vadd.f32 %v542, %v698
        %v747 = vadd.f32 %v543, %v699
        %v748 = vadd.f32 %v544, %v700
        %v749 = vadd.f32 %v545, %v701
        %v750 = vadd.f32 %v546, %v702
        %v751 = vadd.f32 %v547, %v703
        %v752 = vadd.f32 %v548, %v704
        %v753 = vadd.f32 %v549, %v705
        %v754 = vadd.f32 %v550, %v706
        %v755 = vadd.f32 %v551, %v707
        %v756 = vadd.f32 %v552, %v708
        %v757 = vadd.f32 %v553, %v709
        %v758 = vadd.f32 %v554, %v710
        %v759 = vadd.f32 %v555, %v711
        %v760 = vadd.f32 %v556, %v712
        %v761 = vadd.f32 %v557, %v713
        %v762 = vadd.f32 %v558, %v714
        %v763 = vadd.f32 %v559, %v715
        %v764 = vadd.f32 %v560, %v716
        %v765 = vadd.f32 %v561, %v717
        %v766 = vadd.f32 %v562, %v718
        %v767 = vadd.f32 %v563, %v719
        %v768 = vadd.f32 %v564, %v720
        %v769 = vadd.f32 %v565, %v721
        %v770 = vadd.f32 %v566, %v722
        %v771 = vadd.f32 %v567, %v723
        %v772 = vadd.f32 %v568, %v724
        %v773 = vadd.f32 %v569, %v725
        %v774 = vadd.f32 %v570, %v726
        %v775 = vadd.f32 %v571, %v727
        %v776 = vld [vmem:[%s3] sm:$0xff]
        %v777 = vld [vmem:[%s3 + $0x8] sm:$0xff]
        %v778 = vld [vmem:[%s3 + $0x10] sm:$0xff]
        %v779 = vld [vmem:[%s3 + $0x18] sm:$0xff]
        %v780 = vld [vmem:[%s3 + $0x20] sm:$0xff]
        %v781 = vld [vmem:[%s3 + $0x28] sm:$0xff]
        %v782 = vld [vmem:[%s3 + $0x30] sm:$0xff]
        %v783 = vld [vmem:[%s3 + $0x38] sm:$0xff]
        %v784 = vld [vmem:[%s3 + $0x40] sm:$0xff]
        %v785 = vld [vmem:[%s3 + $0x48] sm:$0xff]
        %v786 = vld [vmem:[%s3 + $0x50] sm:$0xff]
        %v787 = vld [vmem:[%s3 + $0x58] sm:$0xff]
        %789 = vset.pattern.permute.xlu0 0
        %790 = vperm.xlu0 %789, %v776
        %v791 = vpop.permute.xlu0 %790
        %794 = vset.pattern.permute.xlu0 0
        %795 = vperm.xlu0 %794, %v777
        %v796 = vpop.permute.xlu0 %795
        %799 = vset.pattern.permute.xlu0 0
        %800 = vperm.xlu0 %799, %v778
        %v801 = vpop.permute.xlu0 %800
        %804 = vset.pattern.permute.xlu0 0
        %805 = vperm.xlu0 %804, %v779
        %v806 = vpop.permute.xlu0 %805
        %809 = vset.pattern.permute.xlu0 0
        %810 = vperm.xlu0 %809, %v780
        %v811 = vpop.permute.xlu0 %810
        %814 = vset.pattern.permute.xlu0 0
        %815 = vperm.xlu0 %814, %v781
        %v816 = vpop.permute.xlu0 %815
        %819 = vset.pattern.permute.xlu0 0
        %820 = vperm.xlu0 %819, %v782
        %v821 = vpop.permute.xlu0 %820
        %824 = vset.pattern.permute.xlu0 0
        %825 = vperm.xlu0 %824, %v783
        %v826 = vpop.permute.xlu0 %825
        %829 = vset.pattern.permute.xlu0 0
        %830 = vperm.xlu0 %829, %v784
        %v831 = vpop.permute.xlu0 %830
        %834 = vset.pattern.permute.xlu0 0
        %835 = vperm.xlu0 %834, %v785
        %v836 = vpop.permute.xlu0 %835
        %839 = vset.pattern.permute.xlu0 0
        %840 = vperm.xlu0 %839, %v786
        %v841 = vpop.permute.xlu0 %840
        %844 = vset.pattern.permute.xlu0 0
        %845 = vperm.xlu0 %844, %v787
        %v846 = vpop.permute.xlu0 %845
        %v848 = vadd.f32 %v728, %v791
        %v849 = vadd.f32 %v729, %v791
        %v850 = vadd.f32 %v730, %v791
        %v851 = vadd.f32 %v731, %v791
        %v852 = vadd.f32 %v732, %v796
        %v853 = vadd.f32 %v733, %v796
        %v854 = vadd.f32 %v734, %v796
        %v855 = vadd.f32 %v735, %v796
        %v856 = vadd.f32 %v736, %v801
        %v857 = vadd.f32 %v737, %v801
        %v858 = vadd.f32 %v738, %v801
        %v859 = vadd.f32 %v739, %v801
        %v860 = vadd.f32 %v740, %v806
        %v861 = vadd.f32 %v741, %v806
        %v862 = vadd.f32 %v742, %v806
        %v863 = vadd.f32 %v743, %v806
        %v864 = vadd.f32 %v744, %v811
        %v865 = vadd.f32 %v745, %v811
        %v866 = vadd.f32 %v746, %v811
        %v867 = vadd.f32 %v747, %v811
        %v868 = vadd.f32 %v748, %v816
        %v869 = vadd.f32 %v749, %v816
        %v870 = vadd.f32 %v750, %v816
        %v871 = vadd.f32 %v751, %v816
        %v872 = vadd.f32 %v752, %v821
        %v873 = vadd.f32 %v753, %v821
        %v874 = vadd.f32 %v754, %v821
        %v875 = vadd.f32 %v755, %v821
        %v876 = vadd.f32 %v756, %v826
        %v877 = vadd.f32 %v757, %v826
        %v878 = vadd.f32 %v758, %v826
        %v879 = vadd.f32 %v759, %v826
        %v880 = vadd.f32 %v760, %v831
        %v881 = vadd.f32 %v761, %v831
        %v882 = vadd.f32 %v762, %v831
        %v883 = vadd.f32 %v763, %v831
        %v884 = vadd.f32 %v764, %v836
        %v885 = vadd.f32 %v765, %v836
        %v886 = vadd.f32 %v766, %v836
        %v887 = vadd.f32 %v767, %v836
        %v888 = vadd.f32 %v768, %v841
        %v889 = vadd.f32 %v769, %v841
        %v890 = vadd.f32 %v770, %v841
        %v891 = vadd.f32 %v771, %v841
        %v892 = vadd.f32 %v772, %v846
        %v893 = vadd.f32 %v773, %v846
        %v894 = vadd.f32 %v774, %v846
        %v895 = vadd.f32 %v775, %v846
        %v896 = vtanh.pop %v848
        %v897 = vtanh.pop %v849
        %v898 = vtanh.pop %v850
        %v899 = vtanh.pop %v851
        %v900 = vtanh.pop %v852
        %v901 = vtanh.pop %v853
        %v902 = vtanh.pop %v854
        %v903 = vtanh.pop %v855
        %v904 = vtanh.pop %v856
        %v905 = vtanh.pop %v857
        %v906 = vtanh.pop %v858
        %v907 = vtanh.pop %v859
        %v908 = vtanh.pop %v860
        %v909 = vtanh.pop %v861
        %v910 = vtanh.pop %v862
        %v911 = vtanh.pop %v863
        %v912 = vtanh.pop %v864
        %v913 = vtanh.pop %v865
        %v914 = vtanh.pop %v866
        %v915 = vtanh.pop %v867
        %v916 = vtanh.pop %v868
        %v917 = vtanh.pop %v869
        %v918 = vtanh.pop %v870
        %v919 = vtanh.pop %v871
        %v920 = vtanh.pop %v872
        %v921 = vtanh.pop %v873
        %v922 = vtanh.pop %v874
        %v923 = vtanh.pop %v875
        %v924 = vtanh.pop %v876
        %v925 = vtanh.pop %v877
        %v926 = vtanh.pop %v878
        %v927 = vtanh.pop %v879
        %v928 = vtanh.pop %v880
        %v929 = vtanh.pop %v881
        %v930 = vtanh.pop %v882
        %v931 = vtanh.pop %v883
        %v932 = vtanh.pop %v884
        %v933 = vtanh.pop %v885
        %v934 = vtanh.pop %v886
        %v935 = vtanh.pop %v887
        %v936 = vtanh.pop %v888
        %v937 = vtanh.pop %v889
        %v938 = vtanh.pop %v890
        %v939 = vtanh.pop %v891
        %v940 = vtanh.pop %v892
        %v941 = vtanh.pop %v893
        %v942 = vtanh.pop %v894
        %v943 = vtanh.pop %v895
        %v944 = vld [vmem:[%s4] sm:$0xff]
        %v945 = vld [vmem:[%s4 + $0x8] sm:$0xff]
        %v946 = vld [vmem:[%s4 + $0x10] sm:$0xff]
        %v947 = vld [vmem:[%s4 + $0x18] sm:$0xff]
        %v948 = vld [vmem:[%s5] sm:$0xff]
        %v949 = vld [vmem:[%s5 + $0x8] sm:$0xff]
        %v950 = vld [vmem:[%s5 + $0x10] sm:$0xff]
        %v951 = vld [vmem:[%s5 + $0x18] sm:$0xff]
        %953 = vset.pattern.permute.xlu0 0
        %954 = vperm.xlu0 %953, %v948
        %v955 = vpop.permute.xlu0 %954
        %958 = vset.pattern.permute.xlu0 0
        %959 = vperm.xlu0 %958, %v949
        %v960 = vpop.permute.xlu0 %959
        %963 = vset.pattern.permute.xlu0 0
        %964 = vperm.xlu0 %963, %v950
        %v965 = vpop.permute.xlu0 %964
        %968 = vset.pattern.permute.xlu0 0
        %969 = vperm.xlu0 %968, %v951
        %v970 = vpop.permute.xlu0 %969
        %vm972 = vcmask 261120
        %v974 = vsel %vm972, %v944, 0
        %v977 = vsel %vm972, %v945, 0
        %v980 = vsel %vm972, %v946, 0
        %v983 = vsel %vm972, %v947, 0
        %985 = vmatprep.subr.mxu0 %v929
        %986 = vmatpush1.msra.mxu0 %v928
        %987 = vmatprep.subr.mxu0 %v933
        %988 = vmatpush1.msra.mxu0 %v932
        %989 = vmatprep.subr.mxu0 %v937
        %990 = vmatpush1.msra.mxu0 %v936
        %991 = vmatprep.subr.mxu0 %v941
        %992 = vmatpush1.msra.mxu0 %v940
        %993 = vmatprep.subr.mxu0 0.0
        %994 = vmatpush1.msra.mxu0 0.0
        %995 = vmatprep.subr.mxu0 0.0
        %996 = vmatpush1.msra.mxu0 0.0
        %997 = vmatprep.subr.mxu0 0.0
        %998 = vmatpush1.msra.mxu0 0.0
        %999 = vmatprep.subr.mxu0 0.0
        %1000 = vmatpush1.msra.mxu0 0.0
        %1001 = vmatprep.subr.mxu0 0.0
        %1002 = vmatpush1.msra.mxu0 0.0
        %1003 = vmatprep.subr.mxu0 0.0
        %1004 = vmatpush1.msra.mxu0 0.0
        %1005 = vmatprep.subr.mxu0 0.0
        %1006 = vmatpush1.msra.mxu0 0.0
        %1007 = vmatprep.subr.mxu0 0.0
        %1008 = vmatpush1.msra.mxu0 0.0
        %1009 = vmatprep.subr.mxu0 0.0
        %1010 = vmatpush1.msra.mxu0 0.0
        %1011 = vmatprep.subr.mxu0 0.0
        %1012 = vmatpush1.msra.mxu0 0.0
        %1013 = vmatprep.subr.mxu0 0.0
        %1014 = vmatpush1.msra.mxu0 0.0
        %1015 = vmatprep.subr.mxu0 0.0
        %1016 = vmatpush1.msra.mxu0 0.0
        %1017 = vmatprep.subr.mxu0 0.0
        %1018 = vmatpush1.msra.mxu0 0.0
        %1019 = vmatprep.subr.mxu0 0.0
        %1020 = vmatpush1.msra.mxu0 0.0
        %1021 = vmatprep.subr.mxu0 0.0
        %1022 = vmatpush1.msra.mxu0 0.0
        %1023 = vmatprep.subr.mxu0 0.0
        %1024 = vmatpush1.msra.mxu0 0.0
        %1025 = vmatprep.subr.mxu0 0.0
        %1026 = vmatpush1.msra.mxu0 0.0
        %1027 = vmatprep.subr.mxu0 0.0
        %1028 = vmatpush1.msra.mxu0 0.0
        %1029 = vmatprep.subr.mxu0 0.0
        %1030 = vmatpush1.msra.mxu0 0.0
        %1031 = vmatprep.subr.mxu0 0.0
        %1032 = vmatpush1.msra.mxu0 0.0
        %1033 = vmatprep.subr.mxu0 0.0
        %1034 = vmatpush1.msra.mxu0 0.0
        %1035 = vmatprep.subr.mxu0 0.0
        %1036 = vmatpush1.msra.mxu0 0.0
        %1037 = vmatprep.subr.mxu0 0.0
        %1038 = vmatpush1.msra.mxu0 0.0
        %1039 = vmatprep.subr.mxu0 0.0
        %1040 = vmatpush1.msra.mxu0 0.0
        %1041 = vmatprep.subr.mxu0 0.0
        %1042 = vmatpush1.msra.mxu0 0.0
        %1043 = vmatprep.subr.mxu0 0.0
        %1044 = vmatpush1.msra.mxu0 0.0
        %1045 = vmatprep.subr.mxu0 0.0
        %1046 = vmatpush1.msra.mxu0 0.0
        %1047 = vmatprep.subr.mxu0 0.0
        %1048 = vmatpush1.msra.mxu0 0.0
        %1049 = vmatprep.mubr.f32.mxu0 0.0
        %1050 = vmatmul.mubr.f32.gmra.mrb[0].mxu0 %v974
        %v1051 = vpop.f32.mrb[0].mxu0
        %v1052 = vadd.f32 %v955, %v1051
        %v1053 = vpop.f32.mrb[0].mxu0
        %v1054 = vadd.f32 %v955, %v1053
        %1055 = vmatprep.mubr.f32.mxu0 0.0
        %1056 = vmatmul.mubr.f32.gmra.mrb[0].mxu0 %v977
        %v1057 = vpop.f32.mrb[0].mxu0
        %v1058 = vadd.f32 %v960, %v1057
        %v1059 = vpop.f32.mrb[0].mxu0
        %v1060 = vadd.f32 %v960, %v1059
        %1061 = vmatprep.mubr.f32.mxu0 0.0
        %1062 = vmatmul.mubr.f32.gmra.mrb[0].mxu0 %v980
        %v1063 = vpop.f32.mrb[0].mxu0
        %v1064 = vadd.f32 %v965, %v1063
        %v1065 = vpop.f32.mrb[0].mxu0
        %v1066 = vadd.f32 %v965, %v1065
        %1067 = vmatprep.mubr.f32.mxu0 0.0
        %1068 = vmatmul.mubr.f32.gmra.mrb[0].mxu0 %v983
        %v1069 = vpop.f32.mrb[0].mxu0
        %v1070 = vadd.f32 %v970, %v1069
        %v1071 = vpop.f32.mrb[0].mxu0
        %v1072 = vadd.f32 %v970, %v1071
        %1073 = vdwg.mxu0
        %1074 = vmatprep.subr.mxu0 %v931
        %1075 = vmatpush1.msra.mxu0 %v930
        %1076 = vmatprep.subr.mxu0 %v935
        %1077 = vmatpush1.msra.mxu0 %v934
        %1078 = vmatprep.subr.mxu0 %v939
        %1079 = vmatpush1.msra.mxu0 %v938
        %1080 = vmatprep.subr.mxu0 %v943
        %1081 = vmatpush1.msra.mxu0 %v942
        %1082 = vmatprep.subr.mxu0 0.0
        %1083 = vmatpush1.msra.mxu0 0.0
        %1084 = vmatprep.subr.mxu0 0.0
        %1085 = vmatpush1.msra.mxu0 0.0
        %1086 = vmatprep.subr.mxu0 0.0
        %1087 = vmatpush1.msra.mxu0 0.0
        %1088 = vmatprep.subr.mxu0 0.0
        %1089 = vmatpush1.msra.mxu0 0.0
        %1090 = vmatprep.subr.mxu0 0.0
        %1091 = vmatpush1.msra.mxu0 0.0
        %1092 = vmatprep.subr.mxu0 0.0
        %1093 = vmatpush1.msra.mxu0 0.0
        %1094 = vmatprep.subr.mxu0 0.0
        %1095 = vmatpush1.msra.mxu0 0.0
        %1096 = vmatprep.subr.mxu0 0.0
        %1097 = vmatpush1.msra.mxu0 0.0
        %1098 = vmatprep.subr.mxu0 0.0
        %1099 = vmatpush1.msra.mxu0 0.0
        %1100 = vmatprep.subr.mxu0 0.0
        %1101 = vmatpush1.msra.mxu0 0.0
        %1102 = vmatprep.subr.mxu0 0.0
        %1103 = vmatpush1.msra.mxu0 0.0
        %1104 = vmatprep.subr.mxu0 0.0
        %1105 = vmatpush1.msra.mxu0 0.0
        %1106 = vmatprep.subr.mxu0 0.0
        %1107 = vmatpush1.msra.mxu0 0.0
        %1108 = vmatprep.subr.mxu0 0.0
        %1109 = vmatpush1.msra.mxu0 0.0
        %1110 = vmatprep.subr.mxu0 0.0
        %1111 = vmatpush1.msra.mxu0 0.0
        %1112 = vmatprep.subr.mxu0 0.0
        %1113 = vmatpush1.msra.mxu0 0.0
        %1114 = vmatprep.subr.mxu0 0.0
        %1115 = vmatpush1.msra.mxu0 0.0
        %1116 = vmatprep.subr.mxu0 0.0
        %1117 = vmatpush1.msra.mxu0 0.0
        %1118 = vmatprep.subr.mxu0 0.0
        %1119 = vmatpush1.msra.mxu0 0.0
        %1120 = vmatprep.subr.mxu0 0.0
        %1121 = vmatpush1.msra.mxu0 0.0
        %1122 = vmatprep.subr.mxu0 0.0
        %1123 = vmatpush1.msra.mxu0 0.0
        %1124 = vmatprep.subr.mxu0 0.0
        %1125 = vmatpush1.msra.mxu0 0.0
        %1126 = vmatprep.subr.mxu0 0.0
        %1127 = vmatpush1.msra.mxu0 0.0
        %1128 = vmatprep.subr.mxu0 0.0
        %1129 = vmatpush1.msra.mxu0 0.0
        %1130 = vmatprep.subr.mxu0 0.0
        %1131 = vmatpush1.msra.mxu0 0.0
        %1132 = vmatprep.subr.mxu0 0.0
        %1133 = vmatpush1.msra.mxu0 0.0
        %1134 = vmatprep.subr.mxu0 0.0
        %1135 = vmatpush1.msra.mxu0 0.0
        %1136 = vmatprep.subr.mxu0 0.0
        %1137 = vmatpush1.msra.mxu0 0.0
        %1138 = vmatprep.mubr.f32.mxu0 0.0
        %1139 = vmatmul.mubr.f32.gmra.mrb[0].mxu0 %v974
        %v1140 = vpop.f32.mrb[0].mxu0
        %v1141 = vadd.f32 %v955, %v1140
        %v1142 = vpop.f32.mrb[0].mxu0
        %v1143 = vadd.f32 %v955, %v1142
        %1144 = vmatprep.mubr.f32.mxu0 0.0
        %1145 = vmatmul.mubr.f32.gmra.mrb[0].mxu0 %v977
        %v1146 = vpop.f32.mrb[0].mxu0
        %v1147 = vadd.f32 %v960, %v1146
        %v1148 = vpop.f32.mrb[0].mxu0
        %v1149 = vadd.f32 %v960, %v1148
        %1150 = vmatprep.mubr.f32.mxu0 0.0
        %1151 = vmatmul.mubr.f32.gmra.mrb[0].mxu0 %v980
        %v1152 = vpop.f32.mrb[0].mxu0
        %v1153 = vadd.f32 %v965, %v1152
        %v1154 = vpop.f32.mrb[0].mxu0
        %v1155 = vadd.f32 %v965, %v1154
        %1156 = vmatprep.mubr.f32.mxu0 0.0
        %1157 = vmatmul.mubr.f32.gmra.mrb[0].mxu0 %v983
        %v1158 = vpop.f32.mrb[0].mxu0
        %v1159 = vadd.f32 %v970, %v1158
        %v1160 = vpop.f32.mrb[0].mxu0
        %v1161 = vadd.f32 %v970, %v1160
        %1162 = vdwg.mxu0
        %v1163 = vtanh.pop %v1052
        %v1164 = vtanh.pop %v1054
        %v1165 = vtanh.pop %v1141
        %v1166 = vtanh.pop %v1143
        %v1167 = vtanh.pop %v1058
        %v1168 = vtanh.pop %v1060
        %v1169 = vtanh.pop %v1147
        %v1170 = vtanh.pop %v1149
        %v1171 = vtanh.pop %v1064
        %v1172 = vtanh.pop %v1066
        %v1173 = vtanh.pop %v1153
        %v1174 = vtanh.pop %v1155
        %v1175 = vtanh.pop %v1070
        %v1176 = vtanh.pop %v1072
        %v1177 = vtanh.pop %v1159
        %v1178 = vtanh.pop %v1161
        %v1179 = vsub.f32 1.0, %v1163
        %v1180 = vsub.f32 1.0, %v1164
        %v1181 = vsub.f32 1.0, %v1165
        %v1182 = vsub.f32 1.0, %v1166
        %v1183 = vsub.f32 1.0, %v1167
        %v1184 = vsub.f32 1.0, %v1168
        %v1185 = vsub.f32 1.0, %v1169
        %v1186 = vsub.f32 1.0, %v1170
        %v1187 = vsub.f32 1.0, %v1171
        %v1188 = vsub.f32 1.0, %v1172
        %v1189 = vsub.f32 1.0, %v1173
        %v1190 = vsub.f32 1.0, %v1174
        %v1191 = vsub.f32 1.0, %v1175
        %v1192 = vsub.f32 1.0, %v1176
        %v1193 = vsub.f32 1.0, %v1177
        %v1194 = vsub.f32 1.0, %v1178
        %v1195 = vmul.f32 %v1179, %v896
        %v1196 = vmul.f32 %v1180, %v897
        %v1197 = vmul.f32 %v1181, %v898
        %v1198 = vmul.f32 %v1182, %v899
        %v1199 = vmul.f32 %v1183, %v900
        %v1200 = vmul.f32 %v1184, %v901
        %v1201 = vmul.f32 %v1185, %v902
        %v1202 = vmul.f32 %v1186, %v903
        %v1203 = vmul.f32 %v1187, %v904
        %v1204 = vmul.f32 %v1188, %v905
        %v1205 = vmul.f32 %v1189, %v906
        %v1206 = vmul.f32 %v1190, %v907
        %v1207 = vmul.f32 %v1191, %v908
        %v1208 = vmul.f32 %v1192, %v909
        %v1209 = vmul.f32 %v1193, %v910
        %v1210 = vmul.f32 %v1194, %v911
        %v1211 = vmul.f32 %v1163, %v912
        %v1212 = vmul.f32 %v1164, %v913
        %v1213 = vmul.f32 %v1165, %v914
        %v1214 = vmul.f32 %v1166, %v915
        %v1215 = vmul.f32 %v1167, %v916
        %v1216 = vmul.f32 %v1168, %v917
        %v1217 = vmul.f32 %v1169, %v918
        %v1218 = vmul.f32 %v1170, %v919
        %v1219 = vmul.f32 %v1171, %v920
        %v1220 = vmul.f32 %v1172, %v921
        %v1221 = vmul.f32 %v1173, %v922
        %v1222 = vmul.f32 %v1174, %v923
        %v1223 = vmul.f32 %v1175, %v924
        %v1224 = vmul.f32 %v1176, %v925
        %v1225 = vmul.f32 %v1177, %v926
        %v1226 = vmul.f32 %v1178, %v927
        %v1227 = vadd.f32 %v1195, %v1211
        %v1228 = vadd.f32 %v1196, %v1212
        %v1229 = vadd.f32 %v1197, %v1213
        %v1230 = vadd.f32 %v1198, %v1214
        %v1231 = vadd.f32 %v1199, %v1215
        %v1232 = vadd.f32 %v1200, %v1216
        %v1233 = vadd.f32 %v1201, %v1217
        %v1234 = vadd.f32 %v1202, %v1218
        %v1235 = vadd.f32 %v1203, %v1219
        %v1236 = vadd.f32 %v1204, %v1220
        %v1237 = vadd.f32 %v1205, %v1221
        %v1238 = vadd.f32 %v1206, %v1222
        %v1239 = vadd.f32 %v1207, %v1223
        %v1240 = vadd.f32 %v1208, %v1224
        %v1241 = vadd.f32 %v1209, %v1225
        %v1242 = vadd.f32 %v1210, %v1226
        %s1243 = scalar_lea.vmem %s4, 32
        %v1244 = vld [vmem:[%s1243] sm:$0xff]
        %v1245 = vld [vmem:[%s1243 + $0x8] sm:$0xff]
        %v1246 = vld [vmem:[%s1243 + $0x10] sm:$0xff]
        %v1247 = vld [vmem:[%s1243 + $0x18] sm:$0xff]
        %s1248 = scalar_lea.vmem %s5, 32
        %v1249 = vld [vmem:[%s1248] sm:$0xff]
        %v1250 = vld [vmem:[%s1248 + $0x8] sm:$0xff]
        %v1251 = vld [vmem:[%s1248 + $0x10] sm:$0xff]
        %v1252 = vld [vmem:[%s1248 + $0x18] sm:$0xff]
        %1254 = vset.pattern.permute.xlu0 0
        %1255 = vperm.xlu0 %1254, %v1249
        %v1256 = vpop.permute.xlu0 %1255
        %1259 = vset.pattern.permute.xlu0 0
        %1260 = vperm.xlu0 %1259, %v1250
        %v1261 = vpop.permute.xlu0 %1260
        %1264 = vset.pattern.permute.xlu0 0
        %1265 = vperm.xlu0 %1264, %v1251
        %v1266 = vpop.permute.xlu0 %1265
        %1269 = vset.pattern.permute.xlu0 0
        %1270 = vperm.xlu0 %1269, %v1252
        %v1271 = vpop.permute.xlu0 %1270
        %v1274 = vsel %vm972, %v1244, 0
        %v1277 = vsel %vm972, %v1245, 0
        %v1280 = vsel %vm972, %v1246, 0
        %v1283 = vsel %vm972, %v1247, 0
        %1285 = vmatprep.subr.mxu0 %v1228
        %1286 = vmatpush1.msra.mxu0 %v1227
        %1287 = vmatprep.subr.mxu0 %v1232
        %1288 = vmatpush1.msra.mxu0 %v1231
        %1289 = vmatprep.subr.mxu0 %v1236
        %1290 = vmatpush1.msra.mxu0 %v1235
        %1291 = vmatprep.subr.mxu0 %v1240
        %1292 = vmatpush1.msra.mxu0 %v1239
        %1293 = vmatprep.subr.mxu0 0.0
        %1294 = vmatpush1.msra.mxu0 0.0
        %1295 = vmatprep.subr.mxu0 0.0
        %1296 = vmatpush1.msra.mxu0 0.0
        %1297 = vmatprep.subr.mxu0 0.0
        %1298 = vmatpush1.msra.mxu0 0.0
        %1299 = vmatprep.subr.mxu0 0.0
        %1300 = vmatpush1.msra.mxu0 0.0
        %1301 = vmatprep.subr.mxu0 0.0
        %1302 = vmatpush1.msra.mxu0 0.0
        %1303 = vmatprep.subr.mxu0 0.0
        %1304 = vmatpush1.msra.mxu0 0.0
        %1305 = vmatprep.subr.mxu0 0.0
        %1306 = vmatpush1.msra.mxu0 0.0
        %1307 = vmatprep.subr.mxu0 0.0
        %1308 = vmatpush1.msra.mxu0 0.0
        %1309 = vmatprep.subr.mxu0 0.0
        %1310 = vmatpush1.msra.mxu0 0.0
        %1311 = vmatprep.subr.mxu0 0.0
        %1312 = vmatpush1.msra.mxu0 0.0
        %1313 = vmatprep.subr.mxu0 0.0
        %1314 = vmatpush1.msra.mxu0 0.0
        %1315 = vmatprep.subr.mxu0 0.0
        %1316 = vmatpush1.msra.mxu0 0.0
        %1317 = vmatprep.subr.mxu0 0.0
        %1318 = vmatpush1.msra.mxu0 0.0
        %1319 = vmatprep.subr.mxu0 0.0
        %1320 = vmatpush1.msra.mxu0 0.0
        %1321 = vmatprep.subr.mxu0 0.0
        %1322 = vmatpush1.msra.mxu0 0.0
        %1323 = vmatprep.subr.mxu0 0.0
        %1324 = vmatpush1.msra.mxu0 0.0
        %1325 = vmatprep.subr.mxu0 0.0
        %1326 = vmatpush1.msra.mxu0 0.0
        %1327 = vmatprep.subr.mxu0 0.0
        %1328 = vmatpush1.msra.mxu0 0.0
        %1329 = vmatprep.subr.mxu0 0.0
        %1330 = vmatpush1.msra.mxu0 0.0
        %1331 = vmatprep.subr.mxu0 0.0
        %1332 = vmatpush1.msra.mxu0 0.0
        %1333 = vmatprep.subr.mxu0 0.0
        %1334 = vmatpush1.msra.mxu0 0.0
        %1335 = vmatprep.subr.mxu0 0.0
        %1336 = vmatpush1.msra.mxu0 0.0
        %1337 = vmatprep.subr.mxu0 0.0
        %1338 = vmatpush1.msra.mxu0 0.0
        %1339 = vmatprep.subr.mxu0 0.0
        %1340 = vmatpush1.msra.mxu0 0.0
        %1341 = vmatprep.subr.mxu0 0.0
        %1342 = vmatpush1.msra.mxu0 0.0
        %1343 = vmatprep.subr.mxu0 0.0
        %1344 = vmatpush1.msra.mxu0 0.0
        %1345 = vmatprep.subr.mxu0 0.0
        %1346 = vmatpush1.msra.mxu0 0.0
        %1347 = vmatprep.subr.mxu0 0.0
        %1348 = vmatpush1.msra.mxu0 0.0
        %1349 = vmatprep.mubr.f32.mxu0 0.0
        %1350 = vmatmul.mubr.f32.gmra.mrb[0].mxu0 %v1274
        %v1351 = vpop.f32.mrb[0].mxu0
        %v1352 = vadd.f32 %v1256, %v1351
        %v1353 = vpop.f32.mrb[0].mxu0
        %v1354 = vadd.f32 %v1256, %v1353
        %1355 = vmatprep.mubr.f32.mxu0 0.0
        %1356 = vmatmul.mubr.f32.gmra.mrb[0].mxu0 %v1277
        %v1357 = vpop.f32.mrb[0].mxu0
        %v1358 = vadd.f32 %v1261, %v1357
        %v1359 = vpop.f32.mrb[0].mxu0
        %v1360 = vadd.f32 %v1261, %v1359
        %1361 = vmatprep.mubr.f32.mxu0 0.0
        %1362 = vmatmul.mubr.f32.gmra.mrb[0].mxu0 %v1280
        %v1363 = vpop.f32.mrb[0].mxu0
        %v1364 = vadd.f32 %v1266, %v1363
        %v1365 = vpop.f32.mrb[0].mxu0
        %v1366 = vadd.f32 %v1266, %v1365
        %1367 = vmatprep.mubr.f32.mxu0 0.0
        %1368 = vmatmul.mubr.f32.gmra.mrb[0].mxu0 %v1283
        %v1369 = vpop.f32.mrb[0].mxu0
        %v1370 = vadd.f32 %v1271, %v1369
        %v1371 = vpop.f32.mrb[0].mxu0
        %v1372 = vadd.f32 %v1271, %v1371
        %1373 = vdwg.mxu0
        %1374 = vmatprep.subr.mxu0 %v1230
        %1375 = vmatpush1.msra.mxu0 %v1229
        %1376 = vmatprep.subr.mxu0 %v1234
        %1377 = vmatpush1.msra.mxu0 %v1233
        %1378 = vmatprep.subr.mxu0 %v1238
        %1379 = vmatpush1.msra.mxu0 %v1237
        %1380 = vmatprep.subr.mxu0 %v1242
        %1381 = vmatpush1.msra.mxu0 %v1241
        %1382 = vmatprep.subr.mxu0 0.0
        %1383 = vmatpush1.msra.mxu0 0.0
        %1384 = vmatprep.subr.mxu0 0.0
        %1385 = vmatpush1.msra.mxu0 0.0
        %1386 = vmatprep.subr.mxu0 0.0
        %1387 = vmatpush1.msra.mxu0 0.0
        %1388 = vmatprep.subr.mxu0 0.0
        %1389 = vmatpush1.msra.mxu0 0.0
        %1390 = vmatprep.subr.mxu0 0.0
        %1391 = vmatpush1.msra.mxu0 0.0
        %1392 = vmatprep.subr.mxu0 0.0
        %1393 = vmatpush1.msra.mxu0 0.0
        %1394 = vmatprep.subr.mxu0 0.0
        %1395 = vmatpush1.msra.mxu0 0.0
        %1396 = vmatprep.subr.mxu0 0.0
        %1397 = vmatpush1.msra.mxu0 0.0
        %1398 = vmatprep.subr.mxu0 0.0
        %1399 = vmatpush1.msra.mxu0 0.0
        %1400 = vmatprep.subr.mxu0 0.0
        %1401 = vmatpush1.msra.mxu0 0.0
        %1402 = vmatprep.subr.mxu0 0.0
        %1403 = vmatpush1.msra.mxu0 0.0
        %1404 = vmatprep.subr.mxu0 0.0
        %1405 = vmatpush1.msra.mxu0 0.0
        %1406 = vmatprep.subr.mxu0 0.0
        %1407 = vmatpush1.msra.mxu0 0.0
        %1408 = vmatprep.subr.mxu0 0.0
        %1409 = vmatpush1.msra.mxu0 0.0
        %1410 = vmatprep.subr.mxu0 0.0
        %1411 = vmatpush1.msra.mxu0 0.0
        %1412 = vmatprep.subr.mxu0 0.0
        %1413 = vmatpush1.msra.mxu0 0.0
        %1414 = vmatprep.subr.mxu0 0.0
        %1415 = vmatpush1.msra.mxu0 0.0
        %1416 = vmatprep.subr.mxu0 0.0
        %1417 = vmatpush1.msra.mxu0 0.0
        %1418 = vmatprep.subr.mxu0 0.0
        %1419 = vmatpush1.msra.mxu0 0.0
        %1420 = vmatprep.subr.mxu0 0.0
        %1421 = vmatpush1.msra.mxu0 0.0
        %1422 = vmatprep.subr.mxu0 0.0
        %1423 = vmatpush1.msra.mxu0 0.0
        %1424 = vmatprep.subr.mxu0 0.0
        %1425 = vmatpush1.msra.mxu0 0.0
        %1426 = vmatprep.subr.mxu0 0.0
        %1427 = vmatpush1.msra.mxu0 0.0
        %1428 = vmatprep.subr.mxu0 0.0
        %1429 = vmatpush1.msra.mxu0 0.0
        %1430 = vmatprep.subr.mxu0 0.0
        %1431 = vmatpush1.msra.mxu0 0.0
        %1432 = vmatprep.subr.mxu0 0.0
        %1433 = vmatpush1.msra.mxu0 0.0
        %1434 = vmatprep.subr.mxu0 0.0
        %1435 = vmatpush1.msra.mxu0 0.0
        %1436 = vmatprep.subr.mxu0 0.0
        %1437 = vmatpush1.msra.mxu0 0.0
        %1438 = vmatprep.mubr.f32.mxu0 0.0
        %1439 = vmatmul.mubr.f32.gmra.mrb[0].mxu0 %v1274
        %v1440 = vpop.f32.mrb[0].mxu0
        %v1441 = vadd.f32 %v1256, %v1440
        %v1442 = vpop.f32.mrb[0].mxu0
        %v1443 = vadd.f32 %v1256, %v1442
        %1444 = vmatprep.mubr.f32.mxu0 0.0
        %1445 = vmatmul.mubr.f32.gmra.mrb[0].mxu0 %v1277
        %v1446 = vpop.f32.mrb[0].mxu0
        %v1447 = vadd.f32 %v1261, %v1446
        %v1448 = vpop.f32.mrb[0].mxu0
        %v1449 = vadd.f32 %v1261, %v1448
        %1450 = vmatprep.mubr.f32.mxu0 0.0
        %1451 = vmatmul.mubr.f32.gmra.mrb[0].mxu0 %v1280
        %v1452 = vpop.f32.mrb[0].mxu0
        %v1453 = vadd.f32 %v1266, %v1452
        %v1454 = vpop.f32.mrb[0].mxu0
        %v1455 = vadd.f32 %v1266, %v1454
        %1456 = vmatprep.mubr.f32.mxu0 0.0
        %1457 = vmatmul.mubr.f32.gmra.mrb[0].mxu0 %v1283
        %v1458 = vpop.f32.mrb[0].mxu0
        %v1459 = vadd.f32 %v1271, %v1458
        %v1460 = vpop.f32.mrb[0].mxu0
        %v1461 = vadd.f32 %v1271, %v1460
        %1462 = vdwg.mxu0
        %v1463 = vtanh.pop %v1352
        %v1464 = vtanh.pop %v1354
        %v1465 = vtanh.pop %v1441
        %v1466 = vtanh.pop %v1443
        %v1467 = vtanh.pop %v1358
        %v1468 = vtanh.pop %v1360
        %v1469 = vtanh.pop %v1447
        %v1470 = vtanh.pop %v1449
        %v1471 = vtanh.pop %v1364
        %v1472 = vtanh.pop %v1366
        %v1473 = vtanh.pop %v1453
        %v1474 = vtanh.pop %v1455
        %v1475 = vtanh.pop %v1370
        %v1476 = vtanh.pop %v1372
        %v1477 = vtanh.pop %v1459
        %v1478 = vtanh.pop %v1461
        %v1479 = vsub.f32 1.0, %v1463
        %v1480 = vsub.f32 1.0, %v1464
        %v1481 = vsub.f32 1.0, %v1465
        %v1482 = vsub.f32 1.0, %v1466
        %v1483 = vsub.f32 1.0, %v1467
        %v1484 = vsub.f32 1.0, %v1468
        %v1485 = vsub.f32 1.0, %v1469
        %v1486 = vsub.f32 1.0, %v1470
        %v1487 = vsub.f32 1.0, %v1471
        %v1488 = vsub.f32 1.0, %v1472
        %v1489 = vsub.f32 1.0, %v1473
        %v1490 = vsub.f32 1.0, %v1474
        %v1491 = vsub.f32 1.0, %v1475
        %v1492 = vsub.f32 1.0, %v1476
        %v1493 = vsub.f32 1.0, %v1477
        %v1494 = vsub.f32 1.0, %v1478
        %v1495 = vmul.f32 %v1479, %v896
        %v1496 = vmul.f32 %v1480, %v897
        %v1497 = vmul.f32 %v1481, %v898
        %v1498 = vmul.f32 %v1482, %v899
        %v1499 = vmul.f32 %v1483, %v900
        %v1500 = vmul.f32 %v1484, %v901
        %v1501 = vmul.f32 %v1485, %v902
        %v1502 = vmul.f32 %v1486, %v903
        %v1503 = vmul.f32 %v1487, %v904
        %v1504 = vmul.f32 %v1488, %v905
        %v1505 = vmul.f32 %v1489, %v906
        %v1506 = vmul.f32 %v1490, %v907
        %v1507 = vmul.f32 %v1491, %v908
        %v1508 = vmul.f32 %v1492, %v909
        %v1509 = vmul.f32 %v1493, %v910
        %v1510 = vmul.f32 %v1494, %v911
        %v1511 = vmul.f32 %v1463, %v912
        %v1512 = vmul.f32 %v1464, %v913
        %v1513 = vmul.f32 %v1465, %v914
        %v1514 = vmul.f32 %v1466, %v915
        %v1515 = vmul.f32 %v1467, %v916
        %v1516 = vmul.f32 %v1468, %v917
        %v1517 = vmul.f32 %v1469, %v918
        %v1518 = vmul.f32 %v1470, %v919
        %v1519 = vmul.f32 %v1471, %v920
        %v1520 = vmul.f32 %v1472, %v921
        %v1521 = vmul.f32 %v1473, %v922
        %v1522 = vmul.f32 %v1474, %v923
        %v1523 = vmul.f32 %v1475, %v924
        %v1524 = vmul.f32 %v1476, %v925
        %v1525 = vmul.f32 %v1477, %v926
        %v1526 = vmul.f32 %v1478, %v927
        %v1527 = vadd.f32 %v1495, %v1511
        %v1528 = vadd.f32 %v1496, %v1512
        %v1529 = vadd.f32 %v1497, %v1513
        %v1530 = vadd.f32 %v1498, %v1514
        %v1531 = vadd.f32 %v1499, %v1515
        %v1532 = vadd.f32 %v1500, %v1516
        %v1533 = vadd.f32 %v1501, %v1517
        %v1534 = vadd.f32 %v1502, %v1518
        %v1535 = vadd.f32 %v1503, %v1519
        %v1536 = vadd.f32 %v1504, %v1520
        %v1537 = vadd.f32 %v1505, %v1521
        %v1538 = vadd.f32 %v1506, %v1522
        %v1539 = vadd.f32 %v1507, %v1523
        %v1540 = vadd.f32 %v1508, %v1524
        %v1541 = vadd.f32 %v1509, %v1525
        %v1542 = vadd.f32 %v1510, %v1526
        %v1543 = vld [vmem:[%s6] sm:$0x1]
        %v1544 = vld [vmem:[#allocation2] sm:$0x1]
        %1546 = vset.pattern.permute.xlu0 0
        %1547 = vperm.xlu0 %1546, %v1544
        %v1548 = vpop.permute.xlu0 %1547
        %v1550 = vlaneseq
        %v1551 = vshrl.u32 %v1550, 7
        %v1552 = vsub.s32 0, %v1551
        %v1553 = vrot.slane %v1548, %v1552
        %v1555 = vsel %vm972, %v1543, 0
        %1557 = vmatprep.subr.mxu0 %v1528
        %1558 = vmatpush1.msra.mxu0 %v1527
        %1559 = vmatprep.subr.mxu0 %v1532
        %1560 = vmatpush1.msra.mxu0 %v1531
        %1561 = vmatprep.subr.mxu0 %v1536
        %1562 = vmatpush1.msra.mxu0 %v1535
        %1563 = vmatprep.subr.mxu0 %v1540
        %1564 = vmatpush1.msra.mxu0 %v1539
        %1565 = vmatprep.subr.mxu0 0.0
        %1566 = vmatpush1.msra.mxu0 0.0
        %1567 = vmatprep.subr.mxu0 0.0
        %1568 = vmatpush1.msra.mxu0 0.0
        %1569 = vmatprep.subr.mxu0 0.0
        %1570 = vmatpush1.msra.mxu0 0.0
        %1571 = vmatprep.subr.mxu0 0.0
        %1572 = vmatpush1.msra.mxu0 0.0
        %1573 = vmatprep.subr.mxu0 0.0
        %1574 = vmatpush1.msra.mxu0 0.0
        %1575 = vmatprep.subr.mxu0 0.0
        %1576 = vmatpush1.msra.mxu0 0.0
        %1577 = vmatprep.subr.mxu0 0.0
        %1578 = vmatpush1.msra.mxu0 0.0
        %1579 = vmatprep.subr.mxu0 0.0
        %1580 = vmatpush1.msra.mxu0 0.0
        %1581 = vmatprep.subr.mxu0 0.0
        %1582 = vmatpush1.msra.mxu0 0.0
        %1583 = vmatprep.subr.mxu0 0.0
        %1584 = vmatpush1.msra.mxu0 0.0
        %1585 = vmatprep.subr.mxu0 0.0
        %1586 = vmatpush1.msra.mxu0 0.0
        %1587 = vmatprep.subr.mxu0 0.0
        %1588 = vmatpush1.msra.mxu0 0.0
        %1589 = vmatprep.subr.mxu0 0.0
        %1590 = vmatpush1.msra.mxu0 0.0
        %1591 = vmatprep.subr.mxu0 0.0
        %1592 = vmatpush1.msra.mxu0 0.0
        %1593 = vmatprep.subr.mxu0 0.0
        %1594 = vmatpush1.msra.mxu0 0.0
        %1595 = vmatprep.subr.mxu0 0.0
        %1596 = vmatpush1.msra.mxu0 0.0
        %1597 = vmatprep.subr.mxu0 0.0
        %1598 = vmatpush1.msra.mxu0 0.0
        %1599 = vmatprep.subr.mxu0 0.0
        %1600 = vmatpush1.msra.mxu0 0.0
        %1601 = vmatprep.subr.mxu0 0.0
        %1602 = vmatpush1.msra.mxu0 0.0
        %1603 = vmatprep.subr.mxu0 0.0
        %1604 = vmatpush1.msra.mxu0 0.0
        %1605 = vmatprep.subr.mxu0 0.0
        %1606 = vmatpush1.msra.mxu0 0.0
        %1607 = vmatprep.subr.mxu0 0.0
        %1608 = vmatpush1.msra.mxu0 0.0
        %1609 = vmatprep.subr.mxu0 0.0
        %1610 = vmatpush1.msra.mxu0 0.0
        %1611 = vmatprep.subr.mxu0 0.0
        %1612 = vmatpush1.msra.mxu0 0.0
        %1613 = vmatprep.subr.mxu0 0.0
        %1614 = vmatpush1.msra.mxu0 0.0
        %1615 = vmatprep.subr.mxu0 0.0
        %1616 = vmatpush1.msra.mxu0 0.0
        %1617 = vmatprep.subr.mxu0 0.0
        %1618 = vmatpush1.msra.mxu0 0.0
        %1619 = vmatprep.subr.mxu0 0.0
        %1620 = vmatpush1.msra.mxu0 0.0
        %1621 = vmatprep.mubr.f32.mxu0 0.0
        %1622 = vmatmul.mubr.f32.gmra.mrb[0].mxu0 %v1555
        %v1623 = vpop.f32.mrb[0].mxu0
        %v1624 = vadd.f32 %v1553, %v1623
        %v1625 = vpop.f32.mrb[0].mxu0
        %v1626 = vadd.f32 %v1553, %v1625
        %1627 = vdwg.mxu0
        %1628 = vmatprep.subr.mxu0 %v1530
        %1629 = vmatpush1.msra.mxu0 %v1529
        %1630 = vmatprep.subr.mxu0 %v1534
        %1631 = vmatpush1.msra.mxu0 %v1533
        %1632 = vmatprep.subr.mxu0 %v1538
        %1633 = vmatpush1.msra.mxu0 %v1537
        %1634 = vmatprep.subr.mxu0 %v1542
        %1635 = vmatpush1.msra.mxu0 %v1541
        %1636 = vmatprep.subr.mxu0 0.0
        %1637 = vmatpush1.msra.mxu0 0.0
        %1638 = vmatprep.subr.mxu0 0.0
        %1639 = vmatpush1.msra.mxu0 0.0
        %1640 = vmatprep.subr.mxu0 0.0
        %1641 = vmatpush1.msra.mxu0 0.0
        %1642 = vmatprep.subr.mxu0 0.0
        %1643 = vmatpush1.msra.mxu0 0.0
        %1644 = vmatprep.subr.mxu0 0.0
        %1645 = vmatpush1.msra.mxu0 0.0
        %1646 = vmatprep.subr.mxu0 0.0
        %1647 = vmatpush1.msra.mxu0 0.0
        %1648 = vmatprep.subr.mxu0 0.0
        %1649 = vmatpush1.msra.mxu0 0.0
        %1650 = vmatprep.subr.mxu0 0.0
        %1651 = vmatpush1.msra.mxu0 0.0
        %1652 = vmatprep.subr.mxu0 0.0
        %1653 = vmatpush1.msra.mxu0 0.0
        %1654 = vmatprep.subr.mxu0 0.0
        %1655 = vmatpush1.msra.mxu0 0.0
        %1656 = vmatprep.subr.mxu0 0.0
        %1657 = vmatpush1.msra.mxu0 0.0
        %1658 = vmatprep.subr.mxu0 0.0
        %1659 = vmatpush1.msra.mxu0 0.0
        %1660 = vmatprep.subr.mxu0 0.0
        %1661 = vmatpush1.msra.mxu0 0.0
        %1662 = vmatprep.subr.mxu0 0.0
        %1663 = vmatpush1.msra.mxu0 0.0
        %1664 = vmatprep.subr.mxu0 0.0
        %1665 = vmatpush1.msra.mxu0 0.0
        %1666 = vmatprep.subr.mxu0 0.0
        %1667 = vmatpush1.msra.mxu0 0.0
        %1668 = vmatprep.subr.mxu0 0.0
        %1669 = vmatpush1.msra.mxu0 0.0
        %1670 = vmatprep.subr.mxu0 0.0
        %1671 = vmatpush1.msra.mxu0 0.0
        %1672 = vmatprep.subr.mxu0 0.0
        %1673 = vmatpush1.msra.mxu0 0.0
        %1674 = vmatprep.subr.mxu0 0.0
        %1675 = vmatpush1.msra.mxu0 0.0
        %1676 = vmatprep.subr.mxu0 0.0
        %1677 = vmatpush1.msra.mxu0 0.0
        %1678 = vmatprep.subr.mxu0 0.0
        %1679 = vmatpush1.msra.mxu0 0.0
        %1680 = vmatprep.subr.mxu0 0.0
        %1681 = vmatpush1.msra.mxu0 0.0
        %1682 = vmatprep.subr.mxu0 0.0
        %1683 = vmatpush1.msra.mxu0 0.0
        %1684 = vmatprep.subr.mxu0 0.0
        %1685 = vmatpush1.msra.mxu0 0.0
        %1686 = vmatprep.subr.mxu0 0.0
        %1687 = vmatpush1.msra.mxu0 0.0
        %1688 = vmatprep.subr.mxu0 0.0
        %1689 = vmatpush1.msra.mxu0 0.0
        %1690 = vmatprep.subr.mxu0 0.0
        %1691 = vmatpush1.msra.mxu0 0.0
        %1692 = vmatprep.mubr.f32.mxu0 0.0
        %1693 = vmatmul.mubr.f32.gmra.mrb[0].mxu0 %v1555
        %v1694 = vpop.f32.mrb[0].mxu0
        %v1695 = vadd.f32 %v1553, %v1694
        %v1696 = vpop.f32.mrb[0].mxu0
        %v1697 = vadd.f32 %v1553, %v1696
        %1698 = vdwg.mxu0
        %v1699 = vld [vmem:[%s8] sm:$0xff]
        %v1700 = vld [vmem:[%s8 + $0x8] sm:$0x1]
        %1702 = vset.pattern.permute.xlu0 0
        %1703 = vperm.xlu0 %1702, %v1699
        %v1704 = vpop.permute.xlu0 %1703
        %1707 = vset.pattern.permute.xlu0 0
        %1708 = vperm.xlu0 %1707, %v1700
        %v1709 = vpop.permute.xlu0 %1708
        %v1711 = vsub.f32 %v511, %v1704
        %v1712 = vsub.f32 %v515, %v1704
        %v1713 = vsub.f32 %v519, %v1704
        %v1714 = vsub.f32 %v523, %v1704
        %v1715 = vsub.f32 %v511, %v1709
        %v1716 = vsub.f32 %v515, %v1709
        %v1717 = vsub.f32 %v519, %v1709
        %v1718 = vsub.f32 %v523, %v1709
        %v1719 = vmul.f32 %v1711, %v1711
        %v1720 = vmul.f32 %v1712, %v1712
        %v1721 = vmul.f32 %v1713, %v1713
        %v1722 = vmul.f32 %v1714, %v1714
        %v1723 = vmul.f32 %v1715, %v1715
        %v1724 = vmul.f32 %v1716, %v1716
        %v1725 = vmul.f32 %v1717, %v1717
        %v1726 = vmul.f32 %v1718, %v1718
        %v1727 = vsub.f32 0.0, %v1719
        %v1728 = vsub.f32 0.0, %v1720
        %v1729 = vsub.f32 0.0, %v1721
        %v1730 = vsub.f32 0.0, %v1722
        %v1731 = vsub.f32 0.0, %v1723
        %v1732 = vsub.f32 0.0, %v1724
        %v1733 = vsub.f32 0.0, %v1725
        %v1734 = vsub.f32 0.0, %v1726
        %v1735 = vstv %s406
        %v1736 = vmul.f32 %v1727, %v1735
        %v1737 = vmul.f32 %v1728, %v1735
        %v1738 = vmul.f32 %v1729, %v1735
        %v1739 = vmul.f32 %v1730, %v1735
        %v1740 = vmul.f32 %v1731, %v1735
        %v1741 = vmul.f32 %v1732, %v1735
        %v1742 = vmul.f32 %v1733, %v1735
        %v1743 = vmul.f32 %v1734, %v1735
        %v1744 = vmul.f32 %v1736, 1.442695
        %v1745 = vpow.pop %v1744
        %v1746 = vmul.f32 %v1737, 1.442695
        %v1747 = vpow.pop %v1746
        %v1748 = vmul.f32 %v1738, 1.442695
        %v1749 = vpow.pop %v1748
        %v1750 = vmul.f32 %v1739, 1.442695
        %v1751 = vpow.pop %v1750
        %v1752 = vmul.f32 %v1740, 1.442695
        %v1753 = vpow.pop %v1752
        %v1754 = vmul.f32 %v1741, 1.442695
        %v1755 = vpow.pop %v1754
        %v1756 = vmul.f32 %v1742, 1.442695
        %v1757 = vpow.pop %v1756
        %v1758 = vmul.f32 %v1743, 1.442695
        %v1759 = vpow.pop %v1758
        %v1760 = vld [vmem:[%s9] sm:$0x1]
        %v1762 = vrot.slane %v414, 7
        %v1764 = vmul.f32 %v412, %v1762
        %v1769 = vcombine.low %v1624, %v1626
        %v1770 = vcombine.low %v1695, %v1697
        %v1772 = vunpack.c.l.s4 1983009808
        %v1773 = vunpack.c.0.s8 %v1772
        %v1774 = vlaneseq
        %v1775 = vshrl.u32 %v1774, 7
        %v1776 = vsub.s32 %v1773, %v1775
        %v1777 = vrot.slane %v1769, %v1776
        %v1779 = vunpack.c.l.s4 1983009808
        %v1780 = vunpack.c.0.s8 %v1779
        %v1781 = vlaneseq
        %v1782 = vshrl.u32 %v1781, 7
        %v1783 = vsub.s32 %v1780, %v1782
        %v1784 = vrot.slane %v1770, %v1783
        %v1785 = vcombine.low %v1777, %v1784
        %v1786 = vrot.slane %v1785, 7
        %v1788 = vmul.f32 %v1764, %v1786
        %v1790 = vlaneseq
        %v1791 = vshrl.u32 %v1790, 7
        %v1792 = vsub.s32 1, %v1791
        %v1793 = vrot.slane %v1788, %v1792
        %v1794 = vlaneseq
        %v1795 = vshrl.u32 %v1794, 7
        %v1796 = vsub.s32 3, %v1795
        %v1797 = vrot.slane %v1788, %v1796
        %v1798 = vlaneseq
        %v1799 = vshrl.u32 %v1798, 7
        %v1800 = vsub.s32 5, %v1799
        %v1801 = vrot.slane %v1788, %v1800
        %v1802 = vlaneseq
        %v1803 = vshrl.u32 %v1802, 7
        %v1804 = vsub.s32 7, %v1803
        %v1805 = vrot.slane %v1788, %v1804
        %vm1810 = vcmask 72704
        %v1812 = vsel %vm1810, %v1760, 0
        %vm1814 = vcmask 1040384
        %v1816 = vsel %vm1814, %v1753, 0
        %v1819 = vsel %vm1814, %v1755, 0
        %v1822 = vsel %vm1814, %v1757, 0
        %v1825 = vsel %vm1814, %v1759, 0
        %1827 = vmatprep.subr.mxu0 %v1747
        %1828 = vmatpush1.msra.mxu0 %v1745
        %1829 = vmatprep.subr.mxu0 %v1819
        %1830 = vmatpush1.msra.mxu0 %v1816
        %1831 = vmatprep.subr.mxu0 0.0
        %1832 = vmatpush1.msra.mxu0 0.0
        %1833 = vmatprep.subr.mxu0 0.0
        %1834 = vmatpush1.msra.mxu0 0.0
        %1835 = vmatprep.subr.mxu0 0.0
        %1836 = vmatpush1.msra.mxu0 0.0
        %1837 = vmatprep.subr.mxu0 0.0
        %1838 = vmatpush1.msra.mxu0 0.0
        %1839 = vmatprep.subr.mxu0 0.0
        %1840 = vmatpush1.msra.mxu0 0.0
        %1841 = vmatprep.subr.mxu0 0.0
        %1842 = vmatpush1.msra.mxu0 0.0
        %1843 = vmatprep.subr.mxu0 0.0
        %1844 = vmatpush1.msra.mxu0 0.0
        %1845 = vmatprep.subr.mxu0 0.0
        %1846 = vmatpush1.msra.mxu0 0.0
        %1847 = vmatprep.subr.mxu0 0.0
        %1848 = vmatpush1.msra.mxu0 0.0
        %1849 = vmatprep.subr.mxu0 0.0
        %1850 = vmatpush1.msra.mxu0 0.0
        %1851 = vmatprep.subr.mxu0 0.0
        %1852 = vmatpush1.msra.mxu0 0.0
        %1853 = vmatprep.subr.mxu0 0.0
        %1854 = vmatpush1.msra.mxu0 0.0
        %1855 = vmatprep.subr.mxu0 0.0
        %1856 = vmatpush1.msra.mxu0 0.0
        %1857 = vmatprep.subr.mxu0 0.0
        %1858 = vmatpush1.msra.mxu0 0.0
        %1859 = vmatprep.subr.mxu0 0.0
        %1860 = vmatpush1.msra.mxu0 0.0
        %1861 = vmatprep.subr.mxu0 0.0
        %1862 = vmatpush1.msra.mxu0 0.0
        %1863 = vmatprep.subr.mxu0 0.0
        %1864 = vmatpush1.msra.mxu0 0.0
        %1865 = vmatprep.subr.mxu0 0.0
        %1866 = vmatpush1.msra.mxu0 0.0
        %1867 = vmatprep.subr.mxu0 0.0
        %1868 = vmatpush1.msra.mxu0 0.0
        %1869 = vmatprep.subr.mxu0 0.0
        %1870 = vmatpush1.msra.mxu0 0.0
        %1871 = vmatprep.subr.mxu0 0.0
        %1872 = vmatpush1.msra.mxu0 0.0
        %1873 = vmatprep.subr.mxu0 0.0
        %1874 = vmatpush1.msra.mxu0 0.0
        %1875 = vmatprep.subr.mxu0 0.0
        %1876 = vmatpush1.msra.mxu0 0.0
        %1877 = vmatprep.subr.mxu0 0.0
        %1878 = vmatpush1.msra.mxu0 0.0
        %1879 = vmatprep.subr.mxu0 0.0
        %1880 = vmatpush1.msra.mxu0 0.0
        %1881 = vmatprep.subr.mxu0 0.0
        %1882 = vmatpush1.msra.mxu0 0.0
        %1883 = vmatprep.subr.mxu0 0.0
        %1884 = vmatpush1.msra.mxu0 0.0
        %1885 = vmatprep.subr.mxu0 0.0
        %1886 = vmatpush1.msra.mxu0 0.0
        %1887 = vmatprep.subr.mxu0 0.0
        %1888 = vmatpush1.msra.mxu0 0.0
        %1889 = vmatprep.subr.mxu0 0.0
        %1890 = vmatpush1.msra.mxu0 0.0
        %1891 = vmatprep.mubr.f32.mxu0 0.0
        %1892 = vmatmul.mubr.f32.gmra.mrb[0].mxu0 %v1812
        %v1893 = vpop.f32.mrb[0].mxu0
        %v1894 = vadd.f32 %v1793, %v1893
        %v1895 = vpop.f32.mrb[0].mxu0
        %v1896 = vadd.f32 %v1797, %v1895
        %1897 = vdwg.mxu0
        %1898 = vmatprep.subr.mxu0 %v1751
        %1899 = vmatpush1.msra.mxu0 %v1749
        %1900 = vmatprep.subr.mxu0 %v1825
        %1901 = vmatpush1.msra.mxu0 %v1822
        %1902 = vmatprep.subr.mxu0 0.0
        %1903 = vmatpush1.msra.mxu0 0.0
        %1904 = vmatprep.subr.mxu0 0.0
        %1905 = vmatpush1.msra.mxu0 0.0
        %1906 = vmatprep.subr.mxu0 0.0
        %1907 = vmatpush1.msra.mxu0 0.0
        %1908 = vmatprep.subr.mxu0 0.0
        %1909 = vmatpush1.msra.mxu0 0.0
        %1910 = vmatprep.subr.mxu0 0.0
        %1911 = vmatpush1.msra.mxu0 0.0
        %1912 = vmatprep.subr.mxu0 0.0
        %1913 = vmatpush1.msra.mxu0 0.0
        %1914 = vmatprep.subr.mxu0 0.0
        %1915 = vmatpush1.msra.mxu0 0.0
        %1916 = vmatprep.subr.mxu0 0.0
        %1917 = vmatpush1.msra.mxu0 0.0
        %1918 = vmatprep.subr.mxu0 0.0
        %1919 = vmatpush1.msra.mxu0 0.0
        %1920 = vmatprep.subr.mxu0 0.0
        %1921 = vmatpush1.msra.mxu0 0.0
        %1922 = vmatprep.subr.mxu0 0.0
        %1923 = vmatpush1.msra.mxu0 0.0
        %1924 = vmatprep.subr.mxu0 0.0
        %1925 = vmatpush1.msra.mxu0 0.0
        %1926 = vmatprep.subr.mxu0 0.0
        %1927 = vmatpush1.msra.mxu0 0.0
        %1928 = vmatprep.subr.mxu0 0.0
        %1929 = vmatpush1.msra.mxu0 0.0
        %1930 = vmatprep.subr.mxu0 0.0
        %1931 = vmatpush1.msra.mxu0 0.0
        %1932 = vmatprep.subr.mxu0 0.0
        %1933 = vmatpush1.msra.mxu0 0.0
        %1934 = vmatprep.subr.mxu0 0.0
        %1935 = vmatpush1.msra.mxu0 0.0
        %1936 = vmatprep.subr.mxu0 0.0
        %1937 = vmatpush1.msra.mxu0 0.0
        %1938 = vmatprep.subr.mxu0 0.0
        %1939 = vmatpush1.msra.mxu0 0.0
        %1940 = vmatprep.subr.mxu0 0.0
        %1941 = vmatpush1.msra.mxu0 0.0
        %1942 = vmatprep.subr.mxu0 0.0
        %1943 = vmatpush1.msra.mxu0 0.0
        %1944 = vmatprep.subr.mxu0 0.0
        %1945 = vmatpush1.msra.mxu0 0.0
        %1946 = vmatprep.subr.mxu0 0.0
        %1947 = vmatpush1.msra.mxu0 0.0
        %1948 = vmatprep.subr.mxu0 0.0
        %1949 = vmatpush1.msra.mxu0 0.0
        %1950 = vmatprep.subr.mxu0 0.0
        %1951 = vmatpush1.msra.mxu0 0.0
        %1952 = vmatprep.subr.mxu0 0.0
        %1953 = vmatpush1.msra.mxu0 0.0
        %1954 = vmatprep.subr.mxu0 0.0
        %1955 = vmatpush1.msra.mxu0 0.0
        %1956 = vmatprep.subr.mxu0 0.0
        %1957 = vmatpush1.msra.mxu0 0.0
        %1958 = vmatprep.subr.mxu0 0.0
        %1959 = vmatpush1.msra.mxu0 0.0
        %1960 = vmatprep.subr.mxu0 0.0
        %1961 = vmatpush1.msra.mxu0 0.0
        %1962 = vmatprep.mubr.f32.mxu0 0.0
        %1963 = vmatmul.mubr.f32.gmra.mrb[0].mxu0 %v1812
        %v1964 = vpop.f32.mrb[0].mxu0
        %v1965 = vadd.f32 %v1801, %v1964
        %v1966 = vpop.f32.mrb[0].mxu0
        %v1967 = vadd.f32 %v1805, %v1966
        %1968 = vdwg.mxu0
        %v1973 = vcombine.low %v1894, %v1896
        %v1974 = vcombine.low %v1965, %v1967
        %v1976 = vunpack.c.l.s4 1966171168
        %v1977 = vunpack.c.0.s8 %v1976
        %v1978 = vlaneseq
        %v1979 = vshrl.u32 %v1978, 7
        %v1980 = vsub.s32 %v1977, %v1979
        %v1981 = vrot.slane %v1973, %v1980
        %v1983 = vunpack.c.l.s4 1966171168
        %v1984 = vunpack.c.0.s8 %v1983
        %v1985 = vlaneseq
        %v1986 = vshrl.u32 %v1985, 7
        %v1987 = vsub.s32 %v1984, %v1986
        %v1988 = vrot.slane %v1974, %v1987
        %v1989 = vcombine.low %v1981, %v1988
        %v1991 = vunpack.c.l.s4 1966171168
        %v1992 = vunpack.c.0.s8 %v1991
        %v1993 = vlaneseq
        %v1994 = vshrl.u32 %v1993, 7
        %v1995 = vsub.s32 %v1992, %v1994
        %v1996 = vrot.slane %v1989, %v1995
        %v1998 = vlaneseq
        %vm1999 = vcmp.ge.s32.totalorder %v1998, 0
        %vm2000 = vcmp.lt.s32.totalorder %v1998, 512
        %vm2001 = vmand %vm1999, %vm2000
        %2002 = vst.msk [vmem:[%s396] sm:$0xf] %vm2001, %v1996
        %s2003 = sand.u32 %s272, 1
        %s2004 = scalar_lea.sflag [#allocation4], %s2003
        %s2005 = sand.u32 %s272, 1
        %s2006 = smul.addr %s2005, 4
        %s2007 = scalar_lea.vmem [#allocation6], %s2006
        // Predicated region
        $region69: #{tpu_custom_call.1} parent=63 // pred_check
          %p2008 = pneg %p282
        $region70: #{tpu_custom_call.1} parent=63 // pred_check_branch
          %2010 = sbr.rel (%p2008) target = $region72
        $region71: #{tpu_custom_call.1} parent=63 // pred_region
          %s2011 = smul.u32 4, %s28
          %s2013 = ssub.s32 64, 64
          %2014 = vsyncadd %s2004, %s2013
          %s2015 = smul.addr %s2011, 16
          %s2016 = scalar_lea.hbm %s11, %s2015
          %s2018 = sshll.u32 %s2007, 4
          %s2019 = int_to_ptr.vmem [resolvable:$true] %s2018
          %2021 = dma.vmem_to_hbm [thread:$0]  %s2019, 64, %s2016, %s2004
        $region72: #{tpu_custom_call.1} parent=63 // pred_fallthru
          _
      $region64: #{tpu_custom_call.1} parent=5 // pred_fallthru
        _
      %p2022 = scmp.le.s32.totalorder 2, %s23
      // Predicated region
      $region73: #{tpu_custom_call.1} parent=5 // pred_check
        %p2023 = pneg %p2022
      $region74: #{tpu_custom_call.1} parent=5 // pred_check_branch
        %2025 = sbr.rel (%p2023) target = $region76
      $region75: #{tpu_custom_call.1} parent=5 // pred_region
        %s2026 = ssub.s32 %s23, 2
        // Predicated region
        $region77: #{tpu_custom_call.1} parent=75 // pred_check
          %p2027 = pneg %p288
        $region78: #{tpu_custom_call.1} parent=75 // pred_check_branch
          %2029 = sbr.rel (%p2027) target = $region80
        $region79: #{tpu_custom_call.1} parent=75 // pred_region
          %s2030 = sand.u32 %s273, 1
          %s2031 = scalar_lea.sflag [#allocation4], %s2030
          %s2032 = sand.u32 %s273, 1
          %s2033 = smul.addr %s2032, 4
          %s2034 = scalar_lea.vmem [#allocation6], %s2033
          %2035 = dma.done %s2031, 64
        $region80: #{tpu_custom_call.1} parent=75 // pred_fallthru
          _
      $region76: #{tpu_custom_call.1} parent=5 // pred_fallthru
        _
    $region6: #{tpu_custom_call.1} parent=1 // loop_footer
      %s27 = sadd.s32 1, %s23
    $region7: #{tpu_custom_call.1} parent=1 // loop_footer_branch
      %22 = sbr.rel target = $region3
    $region8: #{tpu_custom_call.1} parent=1 // loop_exit
      _
    %2036 = vsyncpa [#allocation4], 1
    %s2037 = scalar_lea.sflag [#allocation4], 1
    %2038 = vsyncpa %s2037, 1
    %2039 = vsyncpa [#allocation5], 1
    %s2040 = scalar_lea.sflag [#allocation5], 1
    %2041 = vsyncpa %s2040, 1

</llo_original>
